<compile_context>
chip_gen: v6e
topology: v6e:2x2x1
jax: 0.10.0
libtpu: 0.0.40
codegen_flags: <defaults>
</compile_context>

<pallas_src>
import functools

import jax
import jax.numpy as jnp
from jax.experimental import pallas as pl
from jax.experimental.pallas import tpu as pltpu

IN_DIM = 1024
HID_DIM = 512
OUT_DIM = 128

# 40 MiB scoped VMEM: tm=2048 f32 x double-buffer (16 MiB) + out buffers (2 MiB)
# + resident weights (2.25 MiB) + h intermediate (4 MiB) ~= 25 MiB, safe on
# v5e/v6e (128 MiB) and inside v7x's 64 MiB physical with compiler scratch.
_VMEM_LIMIT = 40 * 1024 * 1024


def _round_up(n, m):
    return ((n + m - 1) // m) * m


@functools.lru_cache(maxsize=1)
def _is_v7x():
    """True iff the default device is a 2-TensorCore v7x chip."""
    try:
        d = jax.devices()[0]
        if d.platform != "tpu":
            return False
        kind = d.device_kind.lower()
        return ("v7" in kind) or ("7x" in kind)
    except Exception:
        return False


@functools.lru_cache(maxsize=1)
def _buffered1_supported():
    """One-time feature probe for pipeline_mode=pl.Buffered(1) (cached)."""
    def k(a_ref, o_ref):
        o_ref[...] = a_ref[...]

    try:
        fn = pl.pallas_call(
            k,
            out_shape=jax.ShapeDtypeStruct((16, 128), jnp.float32),
            grid=(2,),
            in_specs=[pl.BlockSpec((8, 128), lambda i: (0, 0),
                                   pipeline_mode=pl.Buffered(1))],
            out_specs=pl.BlockSpec((8, 128), lambda i: (i, 0)),
        )
        jax.block_until_ready(fn(jnp.zeros((8, 128), jnp.float32)))
        return True
    except Exception:
        return False


def decoder_kernel(x_ref, w1_ref, w2_ref, o_ref):
    # First linear: [tm, 1024] @ [1024, 512] -> [tm, 512] on the MXU, f32 accumulate.
    w1 = w1_ref[...]
    x = x_ref[...]
    if x.dtype != w1.dtype:
        x = x.astype(w1.dtype)            # bf16 MXU path when weights are bf16
    h = jnp.dot(x, w1, preferred_element_type=jnp.float32)
    # LeakyReLU(0.2) in f32 on the VPU (free under the MXU/DMA bottleneck).
    h = jnp.where(h > 0, h, 0.2 * h)
    # Second linear: [tm, 512] @ [512, 128] -> [tm, 128] (~11% of FLOPs).
    w2 = w2_ref[...]
    if h.dtype != w2.dtype:
        h = h.astype(w2.dtype)            # intentional extra rounding for bf16 weights
    o = jnp.dot(h, w2, preferred_element_type=jnp.float32)
    o_ref[...] = o.astype(o_ref.dtype)


def _make_call(Bp, tm, x_dtype, w1_dtype, w2_dtype, single_buffer_weights):
    grid = (pl.cdiv(Bp, tm),)

    def weight_spec(shape):
        if single_buffer_weights:
            # Constant block across the grid -> resident, no double-buffer.
            return pl.BlockSpec(shape, lambda i: (0, 0),
                                pipeline_mode=pl.Buffered(1))
        return pl.BlockSpec(shape, lambda i: (0, 0))

    itemsize = lambda dt: jnp.dtype(dt).itemsize
    flops = 2 * Bp * (IN_DIM * HID_DIM + HID_DIM * OUT_DIM)
    bytes_accessed = (Bp * IN_DIM * itemsize(x_dtype)
                      + IN_DIM * HID_DIM * itemsize(w1_dtype)
                      + HID_DIM * OUT_DIM * itemsize(w2_dtype)
                      + Bp * OUT_DIM * itemsize(x_dtype))

    return pl.pallas_call(
        decoder_kernel,
        out_shape=jax.ShapeDtypeStruct((Bp, OUT_DIM), x_dtype),
        grid_spec=pltpu.PrefetchScalarGridSpec(
            num_scalar_prefetch=0,
            grid=grid,
            in_specs=[
                pl.BlockSpec((tm, IN_DIM), lambda i: (i, 0)),   # x tile (streamed)
                weight_spec((IN_DIM, HID_DIM)),                 # W1 (resident)
                weight_spec((HID_DIM, OUT_DIM)),                # W2 (resident)
            ],
            out_specs=pl.BlockSpec((tm, OUT_DIM), lambda i: (i, 0)),
        ),
        compiler_params=pltpu.CompilerParams(
            dimension_semantics=("parallel",),
            vmem_limit_bytes=_VMEM_LIMIT,
        ),
        cost_estimate=pl.CostEstimate(
            flops=flops, transcendentals=0, bytes_accessed=bytes_accessed),
    )


def decoder_forward(x, w1, w2, *, tm=None, compute_dtype=None):
    """y = leaky_relu(x @ w1, 0.2) @ w2, tiled over the batch.

    compute_dtype: optionally cast the (small) weights, e.g. jnp.bfloat16 on
    v5e where f32 matmul is MXU-pass-bound; x is used in its given dtype.
    """
    if compute_dtype is not None:
        w1 = w1.astype(compute_dtype)
        w2 = w2.astype(compute_dtype)

    B = x.shape[0]
    Bp = _round_up(max(B, 1), 8)                 # sublane alignment only
    if tm is None:
        # Bigger tile when x is bf16 (half the bytes per row in VMEM/HBM).
        tm = 2048 if jnp.dtype(x.dtype).itemsize <= 2 else 1024
    tm = _round_up(min(tm, Bp), 8)               # (tm, 128) out tile needs tm % 8 == 0

    # v7x only: if the grid would collapse to one step, halve the tile so both
    # TensorCores get work ("parallel" axis is sharded across TCs).
    if _is_v7x() and pl.cdiv(Bp, tm) == 1 and tm >= 16 and tm % 16 == 0:
        tm //= 2

    if Bp != B:
        x = jnp.pad(x, ((0, Bp - B), (0, 0)))    # at most 7 pad rows

    call = _make_call(Bp, tm, x.dtype, w1.dtype, w2.dtype, _buffered1_supported())
    out = call(x, w1, w2)
    return out[:B] if Bp != B else out


def init_params(key, dtype=jnp.float32):
    # Deterministic synthetic init (kaiming-uniform-like bound, as in nn.Linear).
    k1, k2 = jax.random.split(key)
    bound1 = 1.0 / jnp.sqrt(IN_DIM)
    bound2 = 1.0 / jnp.sqrt(HID_DIM)
    w1 = jax.random.uniform(k1, (IN_DIM, HID_DIM), jnp.float32, -bound1, bound1)
    w2 = jax.random.uniform(k2, (HID_DIM, OUT_DIM), jnp.float32, -bound2, bound2)
    return w1.astype(dtype), w2.astype(dtype)


def decoder_reference(x, w1, w2):
    h = x @ w1
    h = jnp.where(h > 0, h, 0.2 * h)
    return h @ w2


if __name__ == "__main__":
    key = jax.random.PRNGKey(0)
    kx, kp = jax.random.split(key)

    # ---- f32 path (matches PyTorch defaults), tiny latency-bound batch ----
    B = 8
    x = jax.random.normal(kx, (B, IN_DIM), jnp.float32)
    w1, w2 = init_params(kp, jnp.float32)

    out = jax.block_until_ready(decoder_forward(x, w1, w2))
    ref = decoder_reference(x, w1, w2)
    assert out.shape == (B, OUT_DIM)
    assert jnp.allclose(out, ref, atol=1e-4, rtol=1e-4)

    # ---- bf16-weight path (recommended for tiny, weight-DMA-bound batches);
    #      ragged batch exercises the sublane-only padding ----
    B2 = 20
    x2 = jax.random.normal(kx, (B2, IN_DIM), jnp.float32)
    w1b, w2b = w1.astype(jnp.bfloat16), w2.astype(jnp.bfloat16)
    out2 = jax.block_until_ready(decoder_forward(x2, w1b, w2b))
    ref2 = decoder_reference(x2, w1b.astype(jnp.float32), w2b.astype(jnp.float32))
    assert out2.shape == (B2, OUT_DIM)
    assert jnp.allclose(out2, ref2, atol=3e-2, rtol=3e-2)

    # ---- non-divisible grid (partial last block, no round-up-to-tm padding) ----
    B3 = 136                                   # multiple of 8, not of tm=64
    x3 = jax.random.normal(kx, (B3, IN_DIM), jnp.float32)
    out3 = jax.block_until_ready(decoder_forward(x3, w1, w2, tm=64))
    ref3 = decoder_reference(x3, w1, w2)
    assert out3.shape == (B3, OUT_DIM)
    assert jnp.allclose(out3, ref3, atol=1e-4, rtol=1e-4)

    print("KERNEL_OK")
</pallas_src>

<mosaic_0001>
module attributes {stable_mosaic.version = 11 : i64} {
  func.func @k(%arg0: i32, %arg1: memref<8x128xf32, #tpu.memory_space<vmem>>, %arg2: memref<8x128xf32, #tpu.memory_space<vmem>>) attributes {dimension_semantics = [#tpu.dimension_semantics<arbitrary>], iteration_bounds = array<i64: 2>, scalar_prefetch = 0 : i64, scratch_operands = 0 : i64, tpu.core_type = #tpu.core_type<tc>, window_params = [{pipeline_mode = #tpu.pipeline_mode<synchronous>, transform_indices = @transform_0, window_bounds = array<i64: 8, 128>}, {transform_indices = @transform_1, window_bounds = array<i64: 8, 128>}]} {
    %c0 = arith.constant 0 : index
    %c0_0 = arith.constant 0 : index
    %0 = vector.load %arg1[%c0, %c0_0] : memref<8x128xf32, #tpu.memory_space<vmem>>, vector<8x128xf32>
    %c0_1 = arith.constant 0 : index
    %c0_2 = arith.constant 0 : index
    %1 = vector.load %arg2[%c0_1, %c0_2] : memref<8x128xf32, #tpu.memory_space<vmem>>, vector<8x128xf32>
    tpu.vector_store %arg2[%c0_1, %c0_2], %0 {strides = array<i32>} : memref<8x128xf32, #tpu.memory_space<vmem>>, vector<8x128xf32>,
    return
  }
  func.func @transform_0(%arg0: i32) -> (i32, i32) {
    %c0_i32 = arith.constant 0 : i32
    %c0_i32_0 = arith.constant 0 : i32
    %c0_i32_1 = arith.constant 0 : i32
    return %c0_i32, %c0_i32_0 : i32, i32
  }
  func.func @transform_1(%arg0: i32) -> (i32, i32) {
    %c0_i32 = arith.constant 0 : i32
    %c0_i32_0 = arith.constant 0 : i32
    return %arg0, %c0_i32 : i32, i32
  }
}

module attributes {stable_mosaic.version = 11 : i64} {
  func.func @decoder_kernel(%arg0: i32, %arg1: memref<8x1024xf32, #tpu.memory_space<vmem>>, %arg2: memref<1024x512xf32, #tpu.memory_space<vmem>>, %arg3: memref<512x128xf32, #tpu.memory_space<vmem>>, %arg4: memref<8x128xf32, #tpu.memory_space<vmem>>) attributes {dimension_semantics = [#tpu.dimension_semantics<parallel>], iteration_bounds = array<i64: 1>, scalar_prefetch = 0 : i64, scratch_operands = 0 : i64, tpu.core_type = #tpu.core_type<tc>, window_params = [{transform_indices = @transform_0, window_bounds = array<i64: 8, 1024>}, {pipeline_mode = #tpu.pipeline_mode<synchronous>, transform_indices = @transform_1, window_bounds = array<i64: 1024, 512>}, {pipeline_mode = #tpu.pipeline_mode<synchronous>, transform_indices = @transform_2, window_bounds = array<i64: 512, 128>}, {transform_indices = @transform_3, window_bounds = array<i64: 8, 128>}]} {
    %c0 = arith.constant 0 : index
    %c0_0 = arith.constant 0 : index
    %0 = vector.load %arg2[%c0, %c0_0] : memref<1024x512xf32, #tpu.memory_space<vmem>>, vector<1024x512xf32>
    %c0_1 = arith.constant 0 : index
    %c0_2 = arith.constant 0 : index
    %1 = vector.load %arg1[%c0_1, %c0_2] : memref<8x1024xf32, #tpu.memory_space<vmem>>, vector<8x1024xf32>
    %cst = arith.constant dense<0.000000e+00> : vector<8x512xf32>
    %2 = tpu.matmul %1, %0, %cst {dimension_numbers = #tpu.dot_dimension_numbers<[1], [0], [0], [1], [0, 0, 1, 1], [], []>} : vector<8x1024xf32>, vector<1024x512xf32>, vector<8x512xf32> -> vector<8x512xf32>
    %cst_3 = arith.constant 0.000000e+00 : f32
    %3 = vector.broadcast %cst_3 : f32 to vector<8x512xf32>
    %4 = arith.cmpf ogt, %2, %3 : vector<8x512xf32>
    %cst_4 = arith.constant 2.000000e-01 : f32
    %5 = vector.broadcast %cst_4 : f32 to vector<8x512xf32>
    %6 = arith.mulf %5, %2 : vector<8x512xf32>
    %7 = arith.select %4, %2, %6 : vector<8x512xi1>, vector<8x512xf32>
    %c0_5 = arith.constant 0 : index
    %c0_6 = arith.constant 0 : index
    %8 = vector.load %arg3[%c0_5, %c0_6] : memref<512x128xf32, #tpu.memory_space<vmem>>, vector<512x128xf32>
    %cst_7 = arith.constant dense<0.000000e+00> : vector<8x128xf32>
    %9 = tpu.matmul %7, %8, %cst_7 {dimension_numbers = #tpu.dot_dimension_numbers<[1], [0], [0], [1], [0, 0, 1, 1], [], []>} : vector<8x512xf32>, vector<512x128xf32>, vector<8x128xf32> -> vector<8x128xf32>
    %c0_8 = arith.constant 0 : index
    %c0_9 = arith.constant 0 : index
    %10 = vector.load %arg4[%c0_8, %c0_9] : memref<8x128xf32, #tpu.memory_space<vmem>>, vector<8x128xf32>
    tpu.vector_store %arg4[%c0_8, %c0_9], %9 {strides = array<i32>} : memref<8x128xf32, #tpu.memory_space<vmem>>, vector<8x128xf32>,
    return
  }
  func.func @transform_0(%arg0: i32) -> (i32, i32) {
    %c0_i32 = arith.constant 0 : i32
    %c0_i32_0 = arith.constant 0 : i32
    return %arg0, %c0_i32 : i32, i32
  }
  func.func @transform_1(%arg0: i32) -> (i32, i32) {
    %c0_i32 = arith.constant 0 : i32
    %c0_i32_0 = arith.constant 0 : i32
    %c0_i32_1 = arith.constant 0 : i32
    return %c0_i32, %c0_i32_0 : i32, i32
  }
  func.func @transform_2(%arg0: i32) -> (i32, i32) {
    %c0_i32 = arith.constant 0 : i32
    %c0_i32_0 = arith.constant 0 : i32
    %c0_i32_1 = arith.constant 0 : i32
    return %c0_i32, %c0_i32_0 : i32, i32
  }
  func.func @transform_3(%arg0: i32) -> (i32, i32) {
    %c0_i32 = arith.constant 0 : i32
    %c0_i32_0 = arith.constant 0 : i32
    return %arg0, %c0_i32 : i32, i32
  }
}

</mosaic_0001>

<llo_original>
// kernel: tpu_custom_call.1
$region0: #{tpu_custom_call.1}
  #allocation0 [shape = 'u32[]', space=smem, size = 0x4, offset = 0x4, fixed_abs, tag = 'smem constant byte address 0x4 - core index']
  #allocation1 [shape = 'u32[144,128]{1,0:T(1,128)}', space=vmem, size = 0x12000, scoped, tag = 'internal scratch']
  %s0 = inlined_call_operand.hbm [shape: f32[8,128], index: 0, kind: input, shape index: {}]
  %s1 = inlined_call_operand.hbm [shape: f32[16,128], index: 1, kind: output, shape index: {}]
  %s2 = sld [smem:[#allocation0]]
  $region41: #{tpu_custom_call.1} parent=0
    _
  %s4 = ssub.s32 1, %s2
  %s5 = scalar_select 0, %s4, %s2
  $region1: #{tpu_custom_call.1} parent=0
    #allocation2 [shape = 'u8[4096]{0}', space=vmem, size = 0x1000, scoped, tag = 'input window, operand 0, single buffered']
    #allocation3 [shape = 's32[2]{0}', space=sflag, size = 0x8, scoped, tag = 'scoped memory for tpu_custom_call.1']
    #allocation4 [shape = 's32[2]{0}', space=sflag, size = 0x8, scoped, tag = 'scoped memory for tpu_custom_call.1']
    #allocation5 [shape = 'u8[8192]{0}', space=vmem, size = 0x2000, scoped, tag = 'output window, operand 0']
    %6 = vsyncpa [#allocation3], 0
    %7 = vsyncpa [#allocation4], 0
    %s8 = scalar_lea.sflag [#allocation4], 1
    %9 = vsyncpa %s8, 0
    loop: start=0, step=1, limit=4
    $region2: #{tpu_custom_call.1} parent=1 // loop_pre_header
      _
    $region3: #{tpu_custom_call.1} parent=1 // loop_header
      %s11 = sphi 0, %s15
      %p12 = scmp.ge.s32.totalorder %s11, 4
      %s19 = sphi 0, %s19
      %s21 = sphi 0, %s19
      %s22 = sphi 0, %s21
      %s36 = sphi 0, %s22
      %s42 = sphi 0, %s44
      %s45 = sphi 0, %s42
      %s46 = sphi 0, %s45
      %s62 = sphi 0, %s46
    $region4: #{tpu_custom_call.1} parent=1 // loop_header_branch
      %14 = sbr.rel (%p12) target = $region8
    $region5: #{tpu_custom_call.1} parent=1 // loop_body
      %s16 = ssub.s32 %s11, 1
      %s17 = ssub.s32 %s11, 2
      %s18 = sadd.s32 %s11, 1
      %s20 = sadd.s32 %s19, 1
      %p23 = scmp.eq.s32.totalorder %s11, 1
      %p24 = scmp.ne.s32.totalorder %s19, %s21
      %p25 = scmp.eq.s32.totalorder %s11, 0
      %p26 = por %p24, %p25
      %p27 = scmp.ne.s32.totalorder %s19, %s21
      %p28 = scmp.eq.s32.totalorder %s16, 1
      %p29 = por %p27, %p28
      %p30 = scmp.ne.s32.totalorder %s21, %s22
      %p31 = scmp.eq.s32.totalorder %s16, 0
      %p32 = por %p30, %p31
      %p33 = scmp.ne.s32.totalorder %s21, %s22
      %p34 = scmp.eq.s32.totalorder %s17, 1
      %p35 = por %p33, %p34
      %p37 = scmp.ne.s32.totalorder %s22, %s36
      %p38 = scmp.eq.s32.totalorder %s17, 0
      %p39 = por %p37, %p38
      %s40 = ssub.s32 %s11, %s18
      %p41 = scmp.eq.s32.totalorder %s40, 0
      %s43 = sadd.s32 %s42, 1
      %s44 = scalar_select %p41, %s42, %s43
      %p47 = pneg %p41
      %p48 = scmp.eq.s32.totalorder %s11, 1
      %p49 = por %p47, %p48
      %p50 = scmp.ne.s32.totalorder %s42, %s45
      %p51 = scmp.eq.s32.totalorder %s11, 0
      %p52 = por %p50, %p51
      %p53 = scmp.ne.s32.totalorder %s42, %s45
      %p54 = scmp.eq.s32.totalorder %s16, 1
      %p55 = por %p53, %p54
      %p56 = scmp.ne.s32.totalorder %s45, %s46
      %p57 = scmp.eq.s32.totalorder %s16, 0
      %p58 = por %p56, %p57
      %p59 = scmp.ne.s32.totalorder %s45, %s46
      %p60 = scmp.eq.s32.totalorder %s17, 1
      %p61 = por %p59, %p60
      %p63 = scmp.ne.s32.totalorder %s46, %s62
      %p64 = scmp.eq.s32.totalorder %s17, 0
      %p65 = por %p63, %p64
      %p66 = scmp.le.s32.totalorder 1, %s11
      %p67 = scmp.lt.s32.totalorder %s11, 3
      %p68 = pnand %p66, %p67
      %p69 = pneg %p68
      // Predicated region
      $region9: #{tpu_custom_call.1} parent=5 // pred_check
        _
      $region10: #{tpu_custom_call.1} parent=5 // pred_check_branch
        %71 = sbr.rel (%p68) target = $region12
      $region11: #{tpu_custom_call.1} parent=5 // pred_region
        %s72 = ssub.s32 %s11, 1
        // Predicated region
        $region13: #{tpu_custom_call.1} parent=11 // pred_check
          %p73 = pneg %p32
        $region14: #{tpu_custom_call.1} parent=11 // pred_check_branch
          %75 = sbr.rel (%p73) target = $region16
        $region15: #{tpu_custom_call.1} parent=11 // pred_region
          %s77 = ssub.s32 128, 128
          %78 = vsyncadd [#allocation3], %s77
          %s80 = sshll.u32 [#allocation2], 4
          %s81 = int_to_ptr.vmem [resolvable:$true] %s80
          %83 = dma.hbm_to_vmem [thread:$0]  %s0, 128, %s81, [#allocation3]
        $region16: #{tpu_custom_call.1} parent=11 // pred_fallthru
          _
      $region12: #{tpu_custom_call.1} parent=5 // pred_fallthru
        _
      %p84 = scmp.lt.s32.totalorder %s11, 2
      // Predicated region
      $region17: #{tpu_custom_call.1} parent=5 // pred_check
        %p85 = pneg %p84
      $region18: #{tpu_custom_call.1} parent=5 // pred_check_branch
        %87 = sbr.rel (%p85) target = $region20
      $region19: #{tpu_custom_call.1} parent=5 // pred_region
        _
      $region20: #{tpu_custom_call.1} parent=5 // pred_fallthru
        _
      %p88 = scmp.le.s32.totalorder 1, %s11
      %p89 = scmp.lt.s32.totalorder %s11, 3
      %p90 = pnand %p88, %p89
      %p91 = pneg %p90
      // Predicated region
      $region21: #{tpu_custom_call.1} parent=5 // pred_check
        _
      $region22: #{tpu_custom_call.1} parent=5 // pred_check_branch
        %93 = sbr.rel (%p90) target = $region24
      $region23: #{tpu_custom_call.1} parent=5 // pred_region
        %s94 = ssub.s32 %s11, 1
        // Predicated region
        $region25: #{tpu_custom_call.1} parent=23 // pred_check
          %p95 = pneg %p32
        $region26: #{tpu_custom_call.1} parent=23 // pred_check_branch
          %97 = sbr.rel (%p95) target = $region28
        $region27: #{tpu_custom_call.1} parent=23 // pred_region
          %98 = dma.done [#allocation3], 128
        $region28: #{tpu_custom_call.1} parent=23 // pred_fallthru
          _
        %p99 = pneg %p32
        %p100 = pneg %p29
        %p101 = pneg %p58
        %p102 = pneg %p55
        %s103 = sand.u32 %s45, 1
        %s104 = scalar_lea.sflag [#allocation4], %s103
        %s105 = sand.u32 %s45, 1
        %s106 = smul.addr %s105, 8
        %s107 = scalar_lea.vmem [#allocation5], %s106
        %v108 = vld [vmem:[#allocation2] sm:$0xff]
        %109 = vst [vmem:[%s107] sm:$0xff] %v108
        %s110 = sand.u32 %s45, 1
        %s111 = scalar_lea.sflag [#allocation4], %s110
        %s112 = sand.u32 %s45, 1
        %s113 = smul.addr %s112, 8
        %s114 = scalar_lea.vmem [#allocation5], %s113
        // Predicated region
        $region29: #{tpu_custom_call.1} parent=23 // pred_check
          %p115 = pneg %p55
        $region30: #{tpu_custom_call.1} parent=23 // pred_check_branch
          %117 = sbr.rel (%p115) target = $region32
        $region31: #{tpu_custom_call.1} parent=23 // pred_region
          %s119 = ssub.s32 128, 128
          %120 = vsyncadd %s111, %s119
          %s121 = smul.addr %s16, 128
          %s122 = scalar_lea.hbm %s1, %s121
          %s124 = sshll.u32 %s114, 4
          %s125 = int_to_ptr.vmem [resolvable:$true] %s124
          %127 = dma.vmem_to_hbm [thread:$0]  %s125, 128, %s122, %s111
        $region32: #{tpu_custom_call.1} parent=23 // pred_fallthru
          _
      $region24: #{tpu_custom_call.1} parent=5 // pred_fallthru
        _
      %p128 = scmp.le.s32.totalorder 2, %s11
      // Predicated region
      $region33: #{tpu_custom_call.1} parent=5 // pred_check
        %p129 = pneg %p128
      $region34: #{tpu_custom_call.1} parent=5 // pred_check_branch
        %131 = sbr.rel (%p129) target = $region36
      $region35: #{tpu_custom_call.1} parent=5 // pred_region
        %s132 = ssub.s32 %s11, 2
        // Predicated region
        $region37: #{tpu_custom_call.1} parent=35 // pred_check
          %p133 = pneg %p61
        $region38: #{tpu_custom_call.1} parent=35 // pred_check_branch
          %135 = sbr.rel (%p133) target = $region40
        $region39: #{tpu_custom_call.1} parent=35 // pred_region
          %s136 = sand.u32 %s46, 1
          %s137 = scalar_lea.sflag [#allocation4], %s136
          %s138 = sand.u32 %s46, 1
          %s139 = smul.addr %s138, 8
          %s140 = scalar_lea.vmem [#allocation5], %s139
          %141 = dma.done %s137, 128
        $region40: #{tpu_custom_call.1} parent=35 // pred_fallthru
          _
      $region36: #{tpu_custom_call.1} parent=5 // pred_fallthru
        _
    $region6: #{tpu_custom_call.1} parent=1 // loop_footer
      %s15 = sadd.s32 1, %s11
    $region7: #{tpu_custom_call.1} parent=1 // loop_footer_branch
      %10 = sbr.rel target = $region3
    $region8: #{tpu_custom_call.1} parent=1 // loop_exit
      _
    %142 = vsyncpa [#allocation3], 1
    %s143 = scalar_lea.sflag [#allocation3], 1
    %144 = vsyncpa %s143, 1
    %145 = vsyncpa [#allocation4], 1
    %s146 = scalar_lea.sflag [#allocation4], 1
    %147 = vsyncpa %s146, 1

// kernel: tpu_custom_call.1
$region0: #{tpu_custom_call.1}
  #allocation0 [shape = 'u32[]', space=smem, size = 0x4, offset = 0x4, fixed_abs, tag = 'smem constant byte address 0x4 - core index']
  #allocation1 [shape = 'u32[144,128]{1,0:T(1,128)}', space=vmem, size = 0x12000, scoped, tag = 'internal scratch']
  %s0 = inlined_call_operand.hbm [shape: f32[8,1024], index: 0, kind: input, shape index: {}]
  %s1 = inlined_call_operand.hbm [shape: f32[1024,512], index: 1, kind: input, shape index: {}]
  %s2 = inlined_call_operand.hbm [shape: f32[512,128], index: 2, kind: input, shape index: {}]
  %s3 = inlined_call_operand.hbm [shape: f32[8,128], index: 3, kind: output, shape index: {}]
  %s4 = sld [smem:[#allocation0]]
  $region34: #{tpu_custom_call.1} parent=0
    _
  %s6 = ssub.s32 1, %s4
  %s7 = scalar_select 0, %s6, %s4
  $region1: #{tpu_custom_call.1} parent=0
    #allocation2 [shape = 'u8[32768]{0}', space=vmem, size = 0x8000, scoped, tag = 'input window, operand 0, single buffered']
    #allocation3 [shape = 's32[1]{0}', space=sflag, size = 0x4, scoped, tag = 'scoped memory for tpu_custom_call.1']
    #allocation4 [shape = 's32[1]{0}', space=sflag, size = 0x4, scoped, tag = 'scoped memory for tpu_custom_call.1']
    #allocation5 [shape = 'u8[2097152]{0}', space=vmem, size = 0x200000, scoped, tag = 'input window, operand 1, single buffered']
    #allocation6 [shape = 's32[1]{0}', space=sflag, size = 0x4, scoped, tag = 'scoped memory for tpu_custom_call.1']
    #allocation7 [shape = 'u8[262144]{0}', space=vmem, size = 0x40000, scoped, tag = 'input window, operand 2, single buffered']
    #allocation8 [shape = 'u8[4096]{0}', space=vmem, size = 0x1000, scoped, tag = 'output window, operand 0, single buffered']
    %8 = vsyncpa [#allocation3], 0
    %9 = vsyncpa [#allocation6], 0
    %10 = vsyncpa [#allocation4], 0
    // Predicated region
    $region2: #{tpu_custom_call.1} parent=1 // pred_check
      _
    $region3: #{tpu_custom_call.1} parent=1 // pred_check_branch
      %12 = sbr.rel (0) target = $region5
    $region4: #{tpu_custom_call.1} parent=1 // pred_region
      %s14 = ssub.s32 1024, 1024
      %15 = vsyncadd [#allocation3], %s14
      %s17 = sshll.u32 [#allocation2], 4
      %s18 = int_to_ptr.vmem [resolvable:$true] %s17
      %20 = dma.hbm_to_vmem [thread:$0]  %s0, 1024, %s18, [#allocation3]
    $region5: #{tpu_custom_call.1} parent=1 // pred_fallthru
      _
    // Predicated region
    $region6: #{tpu_custom_call.1} parent=1 // pred_check
      _
    $region7: #{tpu_custom_call.1} parent=1 // pred_check_branch
      %22 = sbr.rel (0) target = $region9
    $region8: #{tpu_custom_call.1} parent=1 // pred_region
      %s24 = ssub.s32 65536, 65536
      %25 = vsyncadd [#allocation6], %s24
      %s26 = sshll.u32 [#allocation5], 4
      %s27 = int_to_ptr.vmem [resolvable:$true] %s26
      %32 = dma.hbm_to_vmem [thread:$0]  %s1, 65536, %s27, [#allocation6], 512, 512, 32
    $region9: #{tpu_custom_call.1} parent=1 // pred_fallthru
      _
    // Predicated region
    $region10: #{tpu_custom_call.1} parent=1 // pred_check
      _
    $region11: #{tpu_custom_call.1} parent=1 // pred_check_branch
      %34 = sbr.rel (0) target = $region13
    $region12: #{tpu_custom_call.1} parent=1 // pred_region
      %s36 = ssub.s32 8192, 8192
      %37 = vsyncadd [#allocation6], %s36
      %s38 = sshll.u32 [#allocation7], 4
      %s39 = int_to_ptr.vmem [resolvable:$true] %s38
      %44 = dma.hbm_to_vmem [thread:$0]  %s2, 8192, %s39, [#allocation6], 128, 128, 8
    $region13: #{tpu_custom_call.1} parent=1 // pred_fallthru
      _
    // Predicated region
    $region14: #{tpu_custom_call.1} parent=1 // pred_check
      _
    $region15: #{tpu_custom_call.1} parent=1 // pred_check_branch
      %46 = sbr.rel (0) target = $region17
    $region16: #{tpu_custom_call.1} parent=1 // pred_region
      %47 = dma.done [#allocation3], 1024
    $region17: #{tpu_custom_call.1} parent=1 // pred_fallthru
      _
    // Predicated region
    $region18: #{tpu_custom_call.1} parent=1 // pred_check
      _
    $region19: #{tpu_custom_call.1} parent=1 // pred_check_branch
      %49 = sbr.rel (0) target = $region21
    $region20: #{tpu_custom_call.1} parent=1 // pred_region
      %50 = dma.done [#allocation6], 65536
    $region21: #{tpu_custom_call.1} parent=1 // pred_fallthru
      _
    // Predicated region
    $region22: #{tpu_custom_call.1} parent=1 // pred_check
      _
    $region23: #{tpu_custom_call.1} parent=1 // pred_check_branch
      %52 = sbr.rel (0) target = $region25
    $region24: #{tpu_custom_call.1} parent=1 // pred_region
      %53 = dma.done [#allocation6], 8192
    $region25: #{tpu_custom_call.1} parent=1 // pred_fallthru
      _
    %v54 = vld [vmem:[#allocation5] sm:$0xff]
    %v55 = vld [vmem:[#allocation5 + $0x8] sm:$0xff]
    %v56 = vld [vmem:[#allocation5 + $0x10] sm:$0xff]
    %v57 = vld [vmem:[#allocation5 + $0x18] sm:$0xff]
    %v58 = vld [vmem:[#allocation5 + $0x20] sm:$0xff]
    %v59 = vld [vmem:[#allocation5 + $0x28] sm:$0xff]
    %v60 = vld [vmem:[#allocation5 + $0x30] sm:$0xff]
    %v61 = vld [vmem:[#allocation5 + $0x38] sm:$0xff]
    %v62 = vld [vmem:[#allocation5 + $0x40] sm:$0xff]
    %v63 = vld [vmem:[#allocation5 + $0x48] sm:$0xff]
    %v64 = vld [vmem:[#allocation5 + $0x50] sm:$0xff]
    %v65 = vld [vmem:[#allocation5 + $0x58] sm:$0xff]
    %v66 = vld [vmem:[#allocation5 + $0x60] sm:$0xff]
    %v67 = vld [vmem:[#allocation5 + $0x68] sm:$0xff]
    %v68 = vld [vmem:[#allocation5 + $0x70] sm:$0xff]
    %v69 = vld [vmem:[#allocation5 + $0x78] sm:$0xff]
    %v70 = vld [vmem:[#allocation5 + $0x80] sm:$0xff]
    %v71 = vld [vmem:[#allocation5 + $0x88] sm:$0xff]
    %v72 = vld [vmem:[#allocation5 + $0x90] sm:$0xff]
    %v73 = vld [vmem:[#allocation5 + $0x98] sm:$0xff]
    %v74 = vld [vmem:[#allocation5 + $0xa0] sm:$0xff]
    %v75 = vld [vmem:[#allocation5 + $0xa8] sm:$0xff]
    %v76 = vld [vmem:[#allocation5 + $0xb0] sm:$0xff]
    %v77 = vld [vmem:[#allocation5 + $0xb8] sm:$0xff]
    %v78 = vld [vmem:[#allocation5 + $0xc0] sm:$0xff]
    %v79 = vld [vmem:[#allocation5 + $0xc8] sm:$0xff]
    %v80 = vld [vmem:[#allocation5 + $0xd0] sm:$0xff]
    %v81 = vld [vmem:[#allocation5 + $0xd8] sm:$0xff]
    %v82 = vld [vmem:[#allocation5 + $0xe0] sm:$0xff]
    %v83 = vld [vmem:[#allocation5 + $0xe8] sm:$0xff]
    %v84 = vld [vmem:[#allocation5 + $0xf0] sm:$0xff]
    %v85 = vld [vmem:[#allocation5 + $0xf8] sm:$0xff]
    %v86 = vld [vmem:[#allocation5 + $0x100] sm:$0xff]
    %v87 = vld [vmem:[#allocation5 + $0x108] sm:$0xff]
    %v88 = vld [vmem:[#allocation5 + $0x110] sm:$0xff]
    %v89 = vld [vmem:[#allocation5 + $0x118] sm:$0xff]
    %v90 = vld [vmem:[#allocation5 + $0x120] sm:$0xff]
    %v91 = vld [vmem:[#allocation5 + $0x128] sm:$0xff]
    %v92 = vld [vmem:[#allocation5 + $0x130] sm:$0xff]
    %v93 = vld [vmem:[#allocation5 + $0x138] sm:$0xff]
    %v94 = vld [vmem:[#allocation5 + $0x140] sm:$0xff]
    %v95 = vld [vmem:[#allocation5 + $0x148] sm:$0xff]
    %v96 = vld [vmem:[#allocation5 + $0x150] sm:$0xff]
    %v97 = vld [vmem:[#allocation5 + $0x158] sm:$0xff]
    %v98 = vld [vmem:[#allocation5 + $0x160] sm:$0xff]
    %v99 = vld [vmem:[#allocation5 + $0x168] sm:$0xff]
    %v100 = vld [vmem:[#allocation5 + $0x170] sm:$0xff]
    %v101 = vld [vmem:[#allocation5 + $0x178] sm:$0xff]
    %v102 = vld [vmem:[#allocation5 + $0x180] sm:$0xff]
    %v103 = vld [vmem:[#allocation5 + $0x188] sm:$0xff]
    %v104 = vld [vmem:[#allocation5 + $0x190] sm:$0xff]
    %v105 = vld [vmem:[#allocation5 + $0x198] sm:$0xff]
    %v106 = vld [vmem:[#allocation5 + $0x1a0] sm:$0xff]
    %v107 = vld [vmem:[#allocation5 + $0x1a8] sm:$0xff]
    %v108 = vld [vmem:[#allocation5 + $0x1b0] sm:$0xff]
    %v109 = vld [vmem:[#allocation5 + $0x1b8] sm:$0xff]
    %v110 = vld [vmem:[#allocation5 + $0x1c0] sm:$0xff]
    %v111 = vld [vmem:[#allocation5 + $0x1c8] sm:$0xff]
    %v112 = vld [vmem:[#allocation5 + $0x1d0] sm:$0xff]
    %v113 = vld [vmem:[#allocation5 + $0x1d8] sm:$0xff]
    %v114 = vld [vmem:[#allocation5 + $0x1e0] sm:$0xff]
    %v115 = vld [vmem:[#allocation5 + $0x1e8] sm:$0xff]
    %v116 = vld [vmem:[#allocation5 + $0x1f0] sm:$0xff]
    %v117 = vld [vmem:[#allocation5 + $0x1f8] sm:$0xff]
    %v118 = vld [vmem:[#allocation5 + $0x200] sm:$0xff]
    %v119 = vld [vmem:[#allocation5 + $0x208] sm:$0xff]
    %v120 = vld [vmem:[#allocation5 + $0x210] sm:$0xff]
    %v121 = vld [vmem:[#allocation5 + $0x218] sm:$0xff]
    %v122 = vld [vmem:[#allocation5 + $0x220] sm:$0xff]
    %v123 = vld [vmem:[#allocation5 + $0x228] sm:$0xff]
    %v124 = vld [vmem:[#allocation5 + $0x230] sm:$0xff]
    %v125 = vld [vmem:[#allocation5 + $0x238] sm:$0xff]
    %v126 = vld [vmem:[#allocation5 + $0x240] sm:$0xff]
    %v127 = vld [vmem:[#allocation5 + $0x248] sm:$0xff]
    %v128 = vld [vmem:[#allocation5 + $0x250] sm:$0xff]
    %v129 = vld [vmem:[#allocation5 + $0x258] sm:$0xff]
    %v130 = vld [vmem:[#allocation5 + $0x260] sm:$0xff]
    %v131 = vld [vmem:[#allocation5 + $0x268] sm:$0xff]
    %v132 = vld [vmem:[#allocation5 + $0x270] sm:$0xff]
    %v133 = vld [vmem:[#allocation5 + $0x278] sm:$0xff]
    %v134 = vld [vmem:[#allocation5 + $0x280] sm:$0xff]
    %v135 = vld [vmem:[#allocation5 + $0x288] sm:$0xff]
    %v136 = vld [vmem:[#allocation5 + $0x290] sm:$0xff]
    %v137 = vld [vmem:[#allocation5 + $0x298] sm:$0xff]
    %v138 = vld [vmem:[#allocation5 + $0x2a0] sm:$0xff]
    %v139 = vld [vmem:[#allocation5 + $0x2a8] sm:$0xff]
    %v140 = vld [vmem:[#allocation5 + $0x2b0] sm:$0xff]
    %v141 = vld [vmem:[#allocation5 + $0x2b8] sm:$0xff]
    %v142 = vld [vmem:[#allocation5 + $0x2c0] sm:$0xff]
    %v143 = vld [vmem:[#allocation5 + $0x2c8] sm:$0xff]
    %v144 = vld [vmem:[#allocation5 + $0x2d0] sm:$0xff]
    %v145 = vld [vmem:[#allocation5 + $0x2d8] sm:$0xff]
    %v146 = vld [vmem:[#allocation5 + $0x2e0] sm:$0xff]
    %v147 = vld [vmem:[#allocation5 + $0x2e8] sm:$0xff]
    %v148 = vld [vmem:[#allocation5 + $0x2f0] sm:$0xff]
    %v149 = vld [vmem:[#allocation5 + $0x2f8] sm:$0xff]
    %v150 = vld [vmem:[#allocation5 + $0x300] sm:$0xff]
    %v151 = vld [vmem:[#allocation5 + $0x308] sm:$0xff]
    %v152 = vld [vmem:[#allocation5 + $0x310] sm:$0xff]
    %v153 = vld [vmem:[#allocation5 + $0x318] sm:$0xff]
    %v154 = vld [vmem:[#allocation5 + $0x320] sm:$0xff]
    %v155 = vld [vmem:[#allocation5 + $0x328] sm:$0xff]
    %v156 = vld [vmem:[#allocation5 + $0x330] sm:$0xff]
    %v157 = vld [vmem:[#allocation5 + $0x338] sm:$0xff]
    %v158 = vld [vmem:[#allocation5 + $0x340] sm:$0xff]
    %v159 = vld [vmem:[#allocation5 + $0x348] sm:$0xff]
    %v160 = vld [vmem:[#allocation5 + $0x350] sm:$0xff]
    %v161 = vld [vmem:[#allocation5 + $0x358] sm:$0xff]
    %v162 = vld [vmem:[#allocation5 + $0x360] sm:$0xff]
    %v163 = vld [vmem:[#allocation5 + $0x368] sm:$0xff]
    %v164 = vld [vmem:[#allocation5 + $0x370] sm:$0xff]
    %v165 = vld [vmem:[#allocation5 + $0x378] sm:$0xff]
    %v166 = vld [vmem:[#allocation5 + $0x380] sm:$0xff]
    %v167 = vld [vmem:[#allocation5 + $0x388] sm:$0xff]
    %v168 = vld [vmem:[#allocation5 + $0x390] sm:$0xff]
    %v169 = vld [vmem:[#allocation5 + $0x398] sm:$0xff]
    %v170 = vld [vmem:[#allocation5 + $0x3a0] sm:$0xff]
    %v171 = vld [vmem:[#allocation5 + $0x3a8] sm:$0xff]
    %v172 = vld [vmem:[#allocation5 + $0x3b0] sm:$0xff]
    %v173 = vld [vmem:[#allocation5 + $0x3b8] sm:$0xff]
    %v174 = vld [vmem:[#allocation5 + $0x3c0] sm:$0xff]
    %v175 = vld [vmem:[#allocation5 + $0x3c8] sm:$0xff]
    %v176 = vld [vmem:[#allocation5 + $0x3d0] sm:$0xff]
    %v177 = vld [vmem:[#allocation5 + $0x3d8] sm:$0xff]
    %v178 = vld [vmem:[#allocation5 + $0x3e0] sm:$0xff]
    %v179 = vld [vmem:[#allocation5 + $0x3e8] sm:$0xff]
    %v180 = vld [vmem:[#allocation5 + $0x3f0] sm:$0xff]
    %v181 = vld [vmem:[#allocation5 + $0x3f8] sm:$0xff]
    %v182 = vld [vmem:[#allocation5 + $0x400] sm:$0xff]
    %v183 = vld [vmem:[#allocation5 + $0x408] sm:$0xff]
    %v184 = vld [vmem:[#allocation5 + $0x410] sm:$0xff]
    %v185 = vld [vmem:[#allocation5 + $0x418] sm:$0xff]
    %v186 = vld [vmem:[#allocation5 + $0x420] sm:$0xff]
    %v187 = vld [vmem:[#allocation5 + $0x428] sm:$0xff]
    %v188 = vld [vmem:[#allocation5 + $0x430] sm:$0xff]
    %v189 = vld [vmem:[#allocation5 + $0x438] sm:$0xff]
    %v190 = vld [vmem:[#allocation5 + $0x440] sm:$0xff]
    %v191 = vld [vmem:[#allocation5 + $0x448] sm:$0xff]
    %v192 = vld [vmem:[#allocation5 + $0x450] sm:$0xff]
    %v193 = vld [vmem:[#allocation5 + $0x458] sm:$0xff]
    %v194 = vld [vmem:[#allocation5 + $0x460] sm:$0xff]
    %v195 = vld [vmem:[#allocation5 + $0x468] sm:$0xff]
    %v196 = vld [vmem:[#allocation5 + $0x470] sm:$0xff]
    %v197 = vld [vmem:[#allocation5 + $0x478] sm:$0xff]
    %v198 = vld [vmem:[#allocation5 + $0x480] sm:$0xff]
    %v199 = vld [vmem:[#allocation5 + $0x488] sm:$0xff]
    %v200 = vld [vmem:[#allocation5 + $0x490] sm:$0xff]
    %v201 = vld [vmem:[#allocation5 + $0x498] sm:$0xff]
    %v202 = vld [vmem:[#allocation5 + $0x4a0] sm:$0xff]
    %v203 = vld [vmem:[#allocation5 + $0x4a8] sm:$0xff]
    %v204 = vld [vmem:[#allocation5 + $0x4b0] sm:$0xff]
    %v205 = vld [vmem:[#allocation5 + $0x4b8] sm:$0xff]
    %v206 = vld [vmem:[#allocation5 + $0x4c0] sm:$0xff]
    %v207 = vld [vmem:[#allocation5 + $0x4c8] sm:$0xff]
    %v208 = vld [vmem:[#allocation5 + $0x4d0] sm:$0xff]
    %v209 = vld [vmem:[#allocation5 + $0x4d8] sm:$0xff]
    %v210 = vld [vmem:[#allocation5 + $0x4e0] sm:$0xff]
    %v211 = vld [vmem:[#allocation5 + $0x4e8] sm:$0xff]
    %v212 = vld [vmem:[#allocation5 + $0x4f0] sm:$0xff]
    %v213 = vld [vmem:[#allocation5 + $0x4f8] sm:$0xff]
    %v214 = vld [vmem:[#allocation5 + $0x500] sm:$0xff]
    %v215 = vld [vmem:[#allocation5 + $0x508] sm:$0xff]
    %v216 = vld [vmem:[#allocation5 + $0x510] sm:$0xff]
    %v217 = vld [vmem:[#allocation5 + $0x518] sm:$0xff]
    %v218 = vld [vmem:[#allocation5 + $0x520] sm:$0xff]
    %v219 = vld [vmem:[#allocation5 + $0x528] sm:$0xff]
    %v220 = vld [vmem:[#allocation5 + $0x530] sm:$0xff]
    %v221 = vld [vmem:[#allocation5 + $0x538] sm:$0xff]
    %v222 = vld [vmem:[#allocation5 + $0x540] sm:$0xff]
    %v223 = vld [vmem:[#allocation5 + $0x548] sm:$0xff]
    %v224 = vld [vmem:[#allocation5 + $0x550] sm:$0xff]
    %v225 = vld [vmem:[#allocation5 + $0x558] sm:$0xff]
    %v226 = vld [vmem:[#allocation5 + $0x560] sm:$0xff]
    %v227 = vld [vmem:[#allocation5 + $0x568] sm:$0xff]
    %v228 = vld [vmem:[#allocation5 + $0x570] sm:$0xff]
    %v229 = vld [vmem:[#allocation5 + $0x578] sm:$0xff]
    %v230 = vld [vmem:[#allocation5 + $0x580] sm:$0xff]
    %v231 = vld [vmem:[#allocation5 + $0x588] sm:$0xff]
    %v232 = vld [vmem:[#allocation5 + $0x590] sm:$0xff]
    %v233 = vld [vmem:[#allocation5 + $0x598] sm:$0xff]
    %v234 = vld [vmem:[#allocation5 + $0x5a0] sm:$0xff]
    %v235 = vld [vmem:[#allocation5 + $0x5a8] sm:$0xff]
    %v236 = vld [vmem:[#allocation5 + $0x5b0] sm:$0xff]
    %v237 = vld [vmem:[#allocation5 + $0x5b8] sm:$0xff]
    %v238 = vld [vmem:[#allocation5 + $0x5c0] sm:$0xff]
    %v239 = vld [vmem:[#allocation5 + $0x5c8] sm:$0xff]
    %v240 = vld [vmem:[#allocation5 + $0x5d0] sm:$0xff]
    %v241 = vld [vmem:[#allocation5 + $0x5d8] sm:$0xff]
    %v242 = vld [vmem:[#allocation5 + $0x5e0] sm:$0xff]
    %v243 = vld [vmem:[#allocation5 + $0x5e8] sm:$0xff]
    %v244 = vld [vmem:[#allocation5 + $0x5f0] sm:$0xff]
    %v245 = vld [vmem:[#allocation5 + $0x5f8] sm:$0xff]
    %v246 = vld [vmem:[#allocation5 + $0x600] sm:$0xff]
    %v247 = vld [vmem:[#allocation5 + $0x608] sm:$0xff]
    %v248 = vld [vmem:[#allocation5 + $0x610] sm:$0xff]
    %v249 = vld [vmem:[#allocation5 + $0x618] sm:$0xff]
    %v250 = vld [vmem:[#allocation5 + $0x620] sm:$0xff]
    %v251 = vld [vmem:[#allocation5 + $0x628] sm:$0xff]
    %v252 = vld [vmem:[#allocation5 + $0x630] sm:$0xff]
    %v253 = vld [vmem:[#allocation5 + $0x638] sm:$0xff]
    %v254 = vld [vmem:[#allocation5 + $0x640] sm:$0xff]
    %v255 = vld [vmem:[#allocation5 + $0x648] sm:$0xff]
    %v256 = vld [vmem:[#allocation5 + $0x650] sm:$0xff]
    %v257 = vld [vmem:[#allocation5 + $0x658] sm:$0xff]
    %v258 = vld [vmem:[#allocation5 + $0x660] sm:$0xff]
    %v259 = vld [vmem:[#allocation5 + $0x668] sm:$0xff]
    %v260 = vld [vmem:[#allocation5 + $0x670] sm:$0xff]
    %v261 = vld [vmem:[#allocation5 + $0x678] sm:$0xff]
    %v262 = vld [vmem:[#allocation5 + $0x680] sm:$0xff]
    %v263 = vld [vmem:[#allocation5 + $0x688] sm:$0xff]
    %v264 = vld [vmem:[#allocation5 + $0x690] sm:$0xff]
    %v265 = vld [vmem:[#allocation5 + $0x698] sm:$0xff]
    %v266 = vld [vmem:[#allocation5 + $0x6a0] sm:$0xff]
    %v267 = vld [vmem:[#allocation5 + $0x6a8] sm:$0xff]
    %v268 = vld [vmem:[#allocation5 + $0x6b0] sm:$0xff]
    %v269 = vld [vmem:[#allocation5 + $0x6b8] sm:$0xff]
    %v270 = vld [vmem:[#allocation5 + $0x6c0] sm:$0xff]
    %v271 = vld [vmem:[#allocation5 + $0x6c8] sm:$0xff]
    %v272 = vld [vmem:[#allocation5 + $0x6d0] sm:$0xff]
    %v273 = vld [vmem:[#allocation5 + $0x6d8] sm:$0xff]
    %v274 = vld [vmem:[#allocation5 + $0x6e0] sm:$0xff]
    %v275 = vld [vmem:[#allocation5 + $0x6e8] sm:$0xff]
    %v276 = vld [vmem:[#allocation5 + $0x6f0] sm:$0xff]
    %v277 = vld [vmem:[#allocation5 + $0x6f8] sm:$0xff]
    %v278 = vld [vmem:[#allocation5 + $0x700] sm:$0xff]
    %v279 = vld [vmem:[#allocation5 + $0x708] sm:$0xff]
    %v280 = vld [vmem:[#allocation5 + $0x710] sm:$0xff]
    %v281 = vld [vmem:[#allocation5 + $0x718] sm:$0xff]
    %v282 = vld [vmem:[#allocation5 + $0x720] sm:$0xff]
    %v283 = vld [vmem:[#allocation5 + $0x728] sm:$0xff]
    %v284 = vld [vmem:[#allocation5 + $0x730] sm:$0xff]
    %v285 = vld [vmem:[#allocation5 + $0x738] sm:$0xff]
    %v286 = vld [vmem:[#allocation5 + $0x740] sm:$0xff]
    %v287 = vld [vmem:[#allocation5 + $0x748] sm:$0xff]
    %v288 = vld [vmem:[#allocation5 + $0x750] sm:$0xff]
    %v289 = vld [vmem:[#allocation5 + $0x758] sm:$0xff]
    %v290 = vld [vmem:[#allocation5 + $0x760] sm:$0xff]
    %v291 = vld [vmem:[#allocation5 + $0x768] sm:$0xff]
    %v292 = vld [vmem:[#allocation5 + $0x770] sm:$0xff]
    %v293 = vld [vmem:[#allocation5 + $0x778] sm:$0xff]
    %v294 = vld [vmem:[#allocation5 + $0x780] sm:$0xff]
    %v295 = vld [vmem:[#allocation5 + $0x788] sm:$0xff]
    %v296 = vld [vmem:[#allocation5 + $0x790] sm:$0xff]
    %v297 = vld [vmem:[#allocation5 + $0x798] sm:$0xff]
    %v298 = vld [vmem:[#allocation5 + $0x7a0] sm:$0xff]
    %v299 = vld [vmem:[#allocation5 + $0x7a8] sm:$0xff]
    %v300 = vld [vmem:[#allocation5 + $0x7b0] sm:$0xff]
    %v301 = vld [vmem:[#allocation5 + $0x7b8] sm:$0xff]
    %v302 = vld [vmem:[#allocation5 + $0x7c0] sm:$0xff]
    %v303 = vld [vmem:[#allocation5 + $0x7c8] sm:$0xff]
    %v304 = vld [vmem:[#allocation5 + $0x7d0] sm:$0xff]
    %v305 = vld [vmem:[#allocation5 + $0x7d8] sm:$0xff]
    %v306 = vld [vmem:[#allocation5 + $0x7e0] sm:$0xff]
    %v307 = vld [vmem:[#allocation5 + $0x7e8] sm:$0xff]
    %v308 = vld [vmem:[#allocation5 + $0x7f0] sm:$0xff]
    %v309 = vld [vmem:[#allocation5 + $0x7f8] sm:$0xff]
    %v310 = vld [vmem:[#allocation5 + $0x800] sm:$0xff]
    %v311 = vld [vmem:[#allocation5 + $0x808] sm:$0xff]
    %v312 = vld [vmem:[#allocation5 + $0x810] sm:$0xff]
    %v313 = vld [vmem:[#allocation5 + $0x818] sm:$0xff]
    %v314 = vld [vmem:[#allocation5 + $0x820] sm:$0xff]
    %v315 = vld [vmem:[#allocation5 + $0x828] sm:$0xff]
    %v316 = vld [vmem:[#allocation5 + $0x830] sm:$0xff]
    %v317 = vld [vmem:[#allocation5 + $0x838] sm:$0xff]
    %v318 = vld [vmem:[#allocation5 + $0x840] sm:$0xff]
    %v319 = vld [vmem:[#allocation5 + $0x848] sm:$0xff]
    %v320 = vld [vmem:[#allocation5 + $0x850] sm:$0xff]
    %v321 = vld [vmem:[#allocation5 + $0x858] sm:$0xff]
    %v322 = vld [vmem:[#allocation5 + $0x860] sm:$0xff]
    %v323 = vld [vmem:[#allocation5 + $0x868] sm:$0xff]
    %v324 = vld [vmem:[#allocation5 + $0x870] sm:$0xff]
    %v325 = vld [vmem:[#allocation5 + $0x878] sm:$0xff]
    %v326 = vld [vmem:[#allocation5 + $0x880] sm:$0xff]
    %v327 = vld [vmem:[#allocation5 + $0x888] sm:$0xff]
    %v328 = vld [vmem:[#allocation5 + $0x890] sm:$0xff]
    %v329 = vld [vmem:[#allocation5 + $0x898] sm:$0xff]
    %v330 = vld [vmem:[#allocation5 + $0x8a0] sm:$0xff]
    %v331 = vld [vmem:[#allocation5 + $0x8a8] sm:$0xff]
    %v332 = vld [vmem:[#allocation5 + $0x8b0] sm:$0xff]
    %v333 = vld [vmem:[#allocation5 + $0x8b8] sm:$0xff]
    %v334 = vld [vmem:[#allocation5 + $0x8c0] sm:$0xff]
    %v335 = vld [vmem:[#allocation5 + $0x8c8] sm:$0xff]
    %v336 = vld [vmem:[#allocation5 + $0x8d0] sm:$0xff]
    %v337 = vld [vmem:[#allocation5 + $0x8d8] sm:$0xff]
    %v338 = vld [vmem:[#allocation5 + $0x8e0] sm:$0xff]
    %v339 = vld [vmem:[#allocation5 + $0x8e8] sm:$0xff]
    %v340 = vld [vmem:[#allocation5 + $0x8f0] sm:$0xff]
    %v341 = vld [vmem:[#allocation5 + $0x8f8] sm:$0xff]
    %v342 = vld [vmem:[#allocation5 + $0x900] sm:$0xff]
    %v343 = vld [vmem:[#allocation5 + $0x908] sm:$0xff]
    %v344 = vld [vmem:[#allocation5 + $0x910] sm:$0xff]
    %v345 = vld [vmem:[#allocation5 + $0x918] sm:$0xff]
    %v346 = vld [vmem:[#allocation5 + $0x920] sm:$0xff]
    %v347 = vld [vmem:[#allocation5 + $0x928] sm:$0xff]
    %v348 = vld [vmem:[#allocation5 + $0x930] sm:$0xff]
    %v349 = vld [vmem:[#allocation5 + $0x938] sm:$0xff]
    %v350 = vld [vmem:[#allocation5 + $0x940] sm:$0xff]
    %v351 = vld [vmem:[#allocation5 + $0x948] sm:$0xff]
    %v352 = vld [vmem:[#allocation5 + $0x950] sm:$0xff]
    %v353 = vld [vmem:[#allocation5 + $0x958] sm:$0xff]
    %v354 = vld [vmem:[#allocation5 + $0x960] sm:$0xff]
    %v355 = vld [vmem:[#allocation5 + $0x968] sm:$0xff]
    %v356 = vld [vmem:[#allocation5 + $0x970] sm:$0xff]
    %v357 = vld [vmem:[#allocation5 + $0x978] sm:$0xff]
    %v358 = vld [vmem:[#allocation5 + $0x980] sm:$0xff]
    %v359 = vld [vmem:[#allocation5 + $0x988] sm:$0xff]
    %v360 = vld [vmem:[#allocation5 + $0x990] sm:$0xff]
    %v361 = vld [vmem:[#allocation5 + $0x998] sm:$0xff]
    %v362 = vld [vmem:[#allocation5 + $0x9a0] sm:$0xff]
    %v363 = vld [vmem:[#allocation5 + $0x9a8] sm:$0xff]
    %v364 = vld [vmem:[#allocation5 + $0x9b0] sm:$0xff]
    %v365 = vld [vmem:[#allocation5 + $0x9b8] sm:$0xff]
    %v366 = vld [vmem:[#allocation5 + $0x9c0] sm:$0xff]
    %v367 = vld [vmem:[#allocation5 + $0x9c8] sm:$0xff]
    %v368 = vld [vmem:[#allocation5 + $0x9d0] sm:$0xff]
    %v369 = vld [vmem:[#allocation5 + $0x9d8] sm:$0xff]
    %v370 = vld [vmem:[#allocation5 + $0x9e0] sm:$0xff]
    %v371 = vld [vmem:[#allocation5 + $0x9e8] sm:$0xff]
    %v372 = vld [vmem:[#allocation5 + $0x9f0] sm:$0xff]
    %v373 = vld [vmem:[#allocation5 + $0x9f8] sm:$0xff]
    %v374 = vld [vmem:[#allocation5 + $0xa00] sm:$0xff]
    %v375 = vld [vmem:[#allocation5 + $0xa08] sm:$0xff]
    %v376 = vld [vmem:[#allocation5 + $0xa10] sm:$0xff]
    %v377 = vld [vmem:[#allocation5 + $0xa18] sm:$0xff]
    %v378 = vld [vmem:[#allocation5 + $0xa20] sm:$0xff]
    %v379 = vld [vmem:[#allocation5 + $0xa28] sm:$0xff]
    %v380 = vld [vmem:[#allocation5 + $0xa30] sm:$0xff]
    %v381 = vld [vmem:[#allocation5 + $0xa38] sm:$0xff]
    %v382 = vld [vmem:[#allocation5 + $0xa40] sm:$0xff]
    %v383 = vld [vmem:[#allocation5 + $0xa48] sm:$0xff]
    %v384 = vld [vmem:[#allocation5 + $0xa50] sm:$0xff]
    %v385 = vld [vmem:[#allocation5 + $0xa58] sm:$0xff]
    %v386 = vld [vmem:[#allocation5 + $0xa60] sm:$0xff]
    %v387 = vld [vmem:[#allocation5 + $0xa68] sm:$0xff]
    %v388 = vld [vmem:[#allocation5 + $0xa70] sm:$0xff]
    %v389 = vld [vmem:[#allocation5 + $0xa78] sm:$0xff]
    %v390 = vld [vmem:[#allocation5 + $0xa80] sm:$0xff]
    %v391 = vld [vmem:[#allocation5 + $0xa88] sm:$0xff]
    %v392 = vld [vmem:[#allocation5 + $0xa90] sm:$0xff]
    %v393 = vld [vmem:[#allocation5 + $0xa98] sm:$0xff]
    %v394 = vld [vmem:[#allocation5 + $0xaa0] sm:$0xff]
    %v395 = vld [vmem:[#allocation5 + $0xaa8] sm:$0xff]
    %v396 = vld [vmem:[#allocation5 + $0xab0] sm:$0xff]
    %v397 = vld [vmem:[#allocation5 + $0xab8] sm:$0xff]
    %v398 = vld [vmem:[#allocation5 + $0xac0] sm:$0xff]
    %v399 = vld [vmem:[#allocation5 + $0xac8] sm:$0xff]
    %v400 = vld [vmem:[#allocation5 + $0xad0] sm:$0xff]
    %v401 = vld [vmem:[#allocation5 + $0xad8] sm:$0xff]
    %v402 = vld [vmem:[#allocation5 + $0xae0] sm:$0xff]
    %v403 = vld [vmem:[#allocation5 + $0xae8] sm:$0xff]
    %v404 = vld [vmem:[#allocation5 + $0xaf0] sm:$0xff]
    %v405 = vld [vmem:[#allocation5 + $0xaf8] sm:$0xff]
    %v406 = vld [vmem:[#allocation5 + $0xb00] sm:$0xff]
    %v407 = vld [vmem:[#allocation5 + $0xb08] sm:$0xff]
    %v408 = vld [vmem:[#allocation5 + $0xb10] sm:$0xff]
    %v409 = vld [vmem:[#allocation5 + $0xb18] sm:$0xff]
    %v410 = vld [vmem:[#allocation5 + $0xb20] sm:$0xff]
    %v411 = vld [vmem:[#allocation5 + $0xb28] sm:$0xff]
    %v412 = vld [vmem:[#allocation5 + $0xb30] sm:$0xff]
    %v413 = vld [vmem:[#allocation5 + $0xb38] sm:$0xff]
    %v414 = vld [vmem:[#allocation5 + $0xb40] sm:$0xff]
    %v415 = vld [vmem:[#allocation5 + $0xb48] sm:$0xff]
    %v416 = vld [vmem:[#allocation5 + $0xb50] sm:$0xff]
    %v417 = vld [vmem:[#allocation5 + $0xb58] sm:$0xff]
    %v418 = vld [vmem:[#allocation5 + $0xb60] sm:$0xff]
    %v419 = vld [vmem:[#allocation5 + $0xb68] sm:$0xff]
    %v420 = vld [vmem:[#allocation5 + $0xb70] sm:$0xff]
    %v421 = vld [vmem:[#allocation5 + $0xb78] sm:$0xff]
    %v422 = vld [vmem:[#allocation5 + $0xb80] sm:$0xff]
    %v423 = vld [vmem:[#allocation5 + $0xb88] sm:$0xff]
    %v424 = vld [vmem:[#allocation5 + $0xb90] sm:$0xff]
    %v425 = vld [vmem:[#allocation5 + $0xb98] sm:$0xff]
    %v426 = vld [vmem:[#allocation5 + $0xba0] sm:$0xff]
    %v427 = vld [vmem:[#allocation5 + $0xba8] sm:$0xff]
    %v428 = vld [vmem:[#allocation5 + $0xbb0] sm:$0xff]
    %v429 = vld [vmem:[#allocation5 + $0xbb8] sm:$0xff]
    %v430 = vld [vmem:[#allocation5 + $0xbc0] sm:$0xff]
    %v431 = vld [vmem:[#allocation5 + $0xbc8] sm:$0xff]
    %v432 = vld [vmem:[#allocation5 + $0xbd0] sm:$0xff]
    %v433 = vld [vmem:[#allocation5 + $0xbd8] sm:$0xff]
    %v434 = vld [vmem:[#allocation5 + $0xbe0] sm:$0xff]
    %v435 = vld [vmem:[#allocation5 + $0xbe8] sm:$0xff]
    %v436 = vld [vmem:[#allocation5 + $0xbf0] sm:$0xff]
    %v437 = vld [vmem:[#allocation5 + $0xbf8] sm:$0xff]
    %v438 = vld [vmem:[#allocation5 + $0xc00] sm:$0xff]
    %v439 = vld [vmem:[#allocation5 + $0xc08] sm:$0xff]
    %v440 = vld [vmem:[#allocation5 + $0xc10] sm:$0xff]
    %v441 = vld [vmem:[#allocation5 + $0xc18] sm:$0xff]
    %v442 = vld [vmem:[#allocation5 + $0xc20] sm:$0xff]
    %v443 = vld [vmem:[#allocation5 + $0xc28] sm:$0xff]
    %v444 = vld [vmem:[#allocation5 + $0xc30] sm:$0xff]
    %v445 = vld [vmem:[#allocation5 + $0xc38] sm:$0xff]
    %v446 = vld [vmem:[#allocation5 + $0xc40] sm:$0xff]
    %v447 = vld [vmem:[#allocation5 + $0xc48] sm:$0xff]
    %v448 = vld [vmem:[#allocation5 + $0xc50] sm:$0xff]
    %v449 = vld [vmem:[#allocation5 + $0xc58] sm:$0xff]
    %v450 = vld [vmem:[#allocation5 + $0xc60] sm:$0xff]
    %v451 = vld [vmem:[#allocation5 + $0xc68] sm:$0xff]
    %v452 = vld [vmem:[#allocation5 + $0xc70] sm:$0xff]
    %v453 = vld [vmem:[#allocation5 + $0xc78] sm:$0xff]
    %v454 = vld [vmem:[#allocation5 + $0xc80] sm:$0xff]
    %v455 = vld [vmem:[#allocation5 + $0xc88] sm:$0xff]
    %v456 = vld [vmem:[#allocation5 + $0xc90] sm:$0xff]
    %v457 = vld [vmem:[#allocation5 + $0xc98] sm:$0xff]
    %v458 = vld [vmem:[#allocation5 + $0xca0] sm:$0xff]
    %v459 = vld [vmem:[#allocation5 + $0xca8] sm:$0xff]
    %v460 = vld [vmem:[#allocation5 + $0xcb0] sm:$0xff]
    %v461 = vld [vmem:[#allocation5 + $0xcb8] sm:$0xff]
    %v462 = vld [vmem:[#allocation5 + $0xcc0] sm:$0xff]
    %v463 = vld [vmem:[#allocation5 + $0xcc8] sm:$0xff]
    %v464 = vld [vmem:[#allocation5 + $0xcd0] sm:$0xff]
    %v465 = vld [vmem:[#allocation5 + $0xcd8] sm:$0xff]
    %v466 = vld [vmem:[#allocation5 + $0xce0] sm:$0xff]
    %v467 = vld [vmem:[#allocation5 + $0xce8] sm:$0xff]
    %v468 = vld [vmem:[#allocation5 + $0xcf0] sm:$0xff]
    %v469 = vld [vmem:[#allocation5 + $0xcf8] sm:$0xff]
    %v470 = vld [vmem:[#allocation5 + $0xd00] sm:$0xff]
    %v471 = vld [vmem:[#allocation5 + $0xd08] sm:$0xff]
    %v472 = vld [vmem:[#allocation5 + $0xd10] sm:$0xff]
    %v473 = vld [vmem:[#allocation5 + $0xd18] sm:$0xff]
    %v474 = vld [vmem:[#allocation5 + $0xd20] sm:$0xff]
    %v475 = vld [vmem:[#allocation5 + $0xd28] sm:$0xff]
    %v476 = vld [vmem:[#allocation5 + $0xd30] sm:$0xff]
    %v477 = vld [vmem:[#allocation5 + $0xd38] sm:$0xff]
    %v478 = vld [vmem:[#allocation5 + $0xd40] sm:$0xff]
    %v479 = vld [vmem:[#allocation5 + $0xd48] sm:$0xff]
    %v480 = vld [vmem:[#allocation5 + $0xd50] sm:$0xff]
    %v481 = vld [vmem:[#allocation5 + $0xd58] sm:$0xff]
    %v482 = vld [vmem:[#allocation5 + $0xd60] sm:$0xff]
    %v483 = vld [vmem:[#allocation5 + $0xd68] sm:$0xff]
    %v484 = vld [vmem:[#allocation5 + $0xd70] sm:$0xff]
    %v485 = vld [vmem:[#allocation5 + $0xd78] sm:$0xff]
    %v486 = vld [vmem:[#allocation5 + $0xd80] sm:$0xff]
    %v487 = vld [vmem:[#allocation5 + $0xd88] sm:$0xff]
    %v488 = vld [vmem:[#allocation5 + $0xd90] sm:$0xff]
    %v489 = vld [vmem:[#allocation5 + $0xd98] sm:$0xff]
    %v490 = vld [vmem:[#allocation5 + $0xda0] sm:$0xff]
    %v491 = vld [vmem:[#allocation5 + $0xda8] sm:$0xff]
    %v492 = vld [vmem:[#allocation5 + $0xdb0] sm:$0xff]
    %v493 = vld [vmem:[#allocation5 + $0xdb8] sm:$0xff]
    %v494 = vld [vmem:[#allocation5 + $0xdc0] sm:$0xff]
    %v495 = vld [vmem:[#allocation5 + $0xdc8] sm:$0xff]
    %v496 = vld [vmem:[#allocation5 + $0xdd0] sm:$0xff]
    %v497 = vld [vmem:[#allocation5 + $0xdd8] sm:$0xff]
    %v498 = vld [vmem:[#allocation5 + $0xde0] sm:$0xff]
    %v499 = vld [vmem:[#allocation5 + $0xde8] sm:$0xff]
    %v500 = vld [vmem:[#allocation5 + $0xdf0] sm:$0xff]
    %v501 = vld [vmem:[#allocation5 + $0xdf8] sm:$0xff]
    %v502 = vld [vmem:[#allocation5 + $0xe00] sm:$0xff]
    %v503 = vld [vmem:[#allocation5 + $0xe08] sm:$0xff]
    %v504 = vld [vmem:[#allocation5 + $0xe10] sm:$0xff]
    %v505 = vld [vmem:[#allocation5 + $0xe18] sm:$0xff]
    %v506 = vld [vmem:[#allocation5 + $0xe20] sm:$0xff]
    %v507 = vld [vmem:[#allocation5 + $0xe28] sm:$0xff]
    %v508 = vld [vmem:[#allocation5 + $0xe30] sm:$0xff]
    %v509 = vld [vmem:[#allocation5 + $0xe38] sm:$0xff]
    %v510 = vld [vmem:[#allocation5 + $0xe40] sm:$0xff]
    %v511 = vld [vmem:[#allocation5 + $0xe48] sm:$0xff]
    %v512 = vld [vmem:[#allocation5 + $0xe50] sm:$0xff]
    %v513 = vld [vmem:[#allocation5 + $0xe58] sm:$0xff]
    %v514 = vld [vmem:[#allocation5 + $0xe60] sm:$0xff]
    %v515 = vld [vmem:[#allocation5 + $0xe68] sm:$0xff]
    %v516 = vld [vmem:[#allocation5 + $0xe70] sm:$0xff]
    %v517 = vld [vmem:[#allocation5 + $0xe78] sm:$0xff]
    %v518 = vld [vmem:[#allocation5 + $0xe80] sm:$0xff]
    %v519 = vld [vmem:[#allocation5 + $0xe88] sm:$0xff]
    %v520 = vld [vmem:[#allocation5 + $0xe90] sm:$0xff]
    %v521 = vld [vmem:[#allocation5 + $0xe98] sm:$0xff]
    %v522 = vld [vmem:[#allocation5 + $0xea0] sm:$0xff]
    %v523 = vld [vmem:[#allocation5 + $0xea8] sm:$0xff]
    %v524 = vld [vmem:[#allocation5 + $0xeb0] sm:$0xff]
    %v525 = vld [vmem:[#allocation5 + $0xeb8] sm:$0xff]
    %v526 = vld [vmem:[#allocation5 + $0xec0] sm:$0xff]
    %v527 = vld [vmem:[#allocation5 + $0xec8] sm:$0xff]
    %v528 = vld [vmem:[#allocation5 + $0xed0] sm:$0xff]
    %v529 = vld [vmem:[#allocation5 + $0xed8] sm:$0xff]
    %v530 = vld [vmem:[#allocation5 + $0xee0] sm:$0xff]
    %v531 = vld [vmem:[#allocation5 + $0xee8] sm:$0xff]
    %v532 = vld [vmem:[#allocation5 + $0xef0] sm:$0xff]
    %v533 = vld [vmem:[#allocation5 + $0xef8] sm:$0xff]
    %v534 = vld [vmem:[#allocation5 + $0xf00] sm:$0xff]
    %v535 = vld [vmem:[#allocation5 + $0xf08] sm:$0xff]
    %v536 = vld [vmem:[#allocation5 + $0xf10] sm:$0xff]
    %v537 = vld [vmem:[#allocation5 + $0xf18] sm:$0xff]
    %v538 = vld [vmem:[#allocation5 + $0xf20] sm:$0xff]
    %v539 = vld [vmem:[#allocation5 + $0xf28] sm:$0xff]
    %v540 = vld [vmem:[#allocation5 + $0xf30] sm:$0xff]
    %v541 = vld [vmem:[#allocation5 + $0xf38] sm:$0xff]
    %v542 = vld [vmem:[#allocation5 + $0xf40] sm:$0xff]
    %v543 = vld [vmem:[#allocation5 + $0xf48] sm:$0xff]
    %v544 = vld [vmem:[#allocation5 + $0xf50] sm:$0xff]
    %v545 = vld [vmem:[#allocation5 + $0xf58] sm:$0xff]
    %v546 = vld [vmem:[#allocation5 + $0xf60] sm:$0xff]
    %v547 = vld [vmem:[#allocation5 + $0xf68] sm:$0xff]
    %v548 = vld [vmem:[#allocation5 + $0xf70] sm:$0xff]
    %v549 = vld [vmem:[#allocation5 + $0xf78] sm:$0xff]
    %v550 = vld [vmem:[#allocation5 + $0xf80] sm:$0xff]
    %v551 = vld [vmem:[#allocation5 + $0xf88] sm:$0xff]
    %v552 = vld [vmem:[#allocation5 + $0xf90] sm:$0xff]
    %v553 = vld [vmem:[#allocation5 + $0xf98] sm:$0xff]
    %v554 = vld [vmem:[#allocation5 + $0xfa0] sm:$0xff]
    %v555 = vld [vmem:[#allocation5 + $0xfa8] sm:$0xff]
    %v556 = vld [vmem:[#allocation5 + $0xfb0] sm:$0xff]
    %v557 = vld [vmem:[#allocation5 + $0xfb8] sm:$0xff]
    %v558 = vld [vmem:[#allocation5 + $0xfc0] sm:$0xff]
    %v559 = vld [vmem:[#allocation5 + $0xfc8] sm:$0xff]
    %v560 = vld [vmem:[#allocation5 + $0xfd0] sm:$0xff]
    %v561 = vld [vmem:[#allocation5 + $0xfd8] sm:$0xff]
    %v562 = vld [vmem:[#allocation5 + $0xfe0] sm:$0xff]
    %v563 = vld [vmem:[#allocation5 + $0xfe8] sm:$0xff]
    %v564 = vld [vmem:[#allocation5 + $0xff0] sm:$0xff]
    %v565 = vld [vmem:[#allocation5 + $0xff8] sm:$0xff]
    %v566 = vld [vmem:[#allocation2] sm:$0xff]
    %v567 = vld [vmem:[#allocation2 + $0x8] sm:$0xff]
    %v568 = vld [vmem:[#allocation2 + $0x10] sm:$0xff]
    %v569 = vld [vmem:[#allocation2 + $0x18] sm:$0xff]
    %v570 = vld [vmem:[#allocation2 + $0x20] sm:$0xff]
    %v571 = vld [vmem:[#allocation2 + $0x28] sm:$0xff]
    %v572 = vld [vmem:[#allocation2 + $0x30] sm:$0xff]
    %v573 = vld [vmem:[#allocation2 + $0x38] sm:$0xff]
    %574 = vmatprep.subr.mxu0 %v115
    %575 = vmatpush1.msra.mxu0 %v114
    %576 = vmatprep.subr.mxu0 %v111
    %577 = vmatpush1.msra.mxu0 %v110
    %578 = vmatprep.subr.mxu0 %v107
    %579 = vmatpush1.msra.mxu0 %v106
    %580 = vmatprep.subr.mxu0 %v103
    %581 = vmatpush1.msra.mxu0 %v102
    %582 = vmatprep.subr.mxu0 %v99
    %583 = vmatpush1.msra.mxu0 %v98
    %584 = vmatprep.subr.mxu0 %v95
    %585 = vmatpush1.msra.mxu0 %v94
    %586 = vmatprep.subr.mxu0 %v91
    %587 = vmatpush1.msra.mxu0 %v90
    %588 = vmatprep.subr.mxu0 %v87
    %589 = vmatpush1.msra.mxu0 %v86
    %590 = vmatprep.subr.mxu0 %v83
    %591 = vmatpush1.msra.mxu0 %v82
    %592 = vmatprep.subr.mxu0 %v79
    %593 = vmatpush1.msra.mxu0 %v78
    %594 = vmatprep.subr.mxu0 %v75
    %595 = vmatpush1.msra.mxu0 %v74
    %596 = vmatprep.subr.mxu0 %v71
    %597 = vmatpush1.msra.mxu0 %v70
    %598 = vmatprep.subr.mxu0 %v67
    %599 = vmatpush1.msra.mxu0 %v66
    %600 = vmatprep.subr.mxu0 %v63
    %601 = vmatpush1.msra.mxu0 %v62
    %602 = vmatprep.subr.mxu0 %v59
    %603 = vmatpush1.msra.mxu0 %v58
    %604 = vmatprep.subr.mxu0 %v55
    %605 = vmatpush1.msra.mxu0 %v54
    %606 = vmatprep.subr.mxu0 %v179
    %607 = vmatpush2.msra.mxu0 %v178
    %608 = vmatprep.subr.mxu0 %v175
    %609 = vmatpush2.msra.mxu0 %v174
    %610 = vmatprep.subr.mxu0 %v171
    %611 = vmatpush2.msra.mxu0 %v170
    %612 = vmatprep.subr.mxu0 %v167
    %613 = vmatpush2.msra.mxu0 %v166
    %614 = vmatprep.subr.mxu0 %v163
    %615 = vmatpush2.msra.mxu0 %v162
    %616 = vmatprep.subr.mxu0 %v159
    %617 = vmatpush2.msra.mxu0 %v158
    %618 = vmatprep.subr.mxu0 %v155
    %619 = vmatpush2.msra.mxu0 %v154
    %620 = vmatprep.subr.mxu0 %v151
    %621 = vmatpush2.msra.mxu0 %v150
    %622 = vmatprep.subr.mxu0 %v147
    %623 = vmatpush2.msra.mxu0 %v146
    %624 = vmatprep.subr.mxu0 %v143
    %625 = vmatpush2.msra.mxu0 %v142
    %626 = vmatprep.subr.mxu0 %v139
    %627 = vmatpush2.msra.mxu0 %v138
    %628 = vmatprep.subr.mxu0 %v135
    %629 = vmatpush2.msra.mxu0 %v134
    %630 = vmatprep.subr.mxu0 %v131
    %631 = vmatpush2.msra.mxu0 %v130
    %632 = vmatprep.subr.mxu0 %v127
    %633 = vmatpush2.msra.mxu0 %v126
    %634 = vmatprep.subr.mxu0 %v123
    %635 = vmatpush2.msra.mxu0 %v122
    %636 = vmatprep.subr.mxu0 %v119
    %637 = vmatpush2.msra.mxu0 %v118
    %638 = vmatprep.mubr.f32.mxu0 %v567
    %639 = vmatmul.mubr.f32.gmra.mxu0 %v566
    %v640 = vpop.f32.mrf.mxu0
    %v641 = vadd.f32 0.0, %v640
    %v642 = vpop.f32.mrf.mxu0
    %v643 = vadd.f32 0.0, %v642
    %644 = vdwg.mxu0
    %645 = vmatprep.subr.mxu0 %v243
    %646 = vmatpush1.msra.mxu0 %v242
    %647 = vmatprep.subr.mxu0 %v239
    %648 = vmatpush1.msra.mxu0 %v238
    %649 = vmatprep.subr.mxu0 %v235
    %650 = vmatpush1.msra.mxu0 %v234
    %651 = vmatprep.subr.mxu0 %v231
    %652 = vmatpush1.msra.mxu0 %v230
    %653 = vmatprep.subr.mxu0 %v227
    %654 = vmatpush1.msra.mxu0 %v226
    %655 = vmatprep.subr.mxu0 %v223
    %656 = vmatpush1.msra.mxu0 %v222
    %657 = vmatprep.subr.mxu0 %v219
    %658 = vmatpush1.msra.mxu0 %v218
    %659 = vmatprep.subr.mxu0 %v215
    %660 = vmatpush1.msra.mxu0 %v214
    %661 = vmatprep.subr.mxu0 %v211
    %662 = vmatpush1.msra.mxu0 %v210
    %663 = vmatprep.subr.mxu0 %v207
    %664 = vmatpush1.msra.mxu0 %v206
    %665 = vmatprep.subr.mxu0 %v203
    %666 = vmatpush1.msra.mxu0 %v202
    %667 = vmatprep.subr.mxu0 %v199
    %668 = vmatpush1.msra.mxu0 %v198
    %669 = vmatprep.subr.mxu0 %v195
    %670 = vmatpush1.msra.mxu0 %v194
    %671 = vmatprep.subr.mxu0 %v191
    %672 = vmatpush1.msra.mxu0 %v190
    %673 = vmatprep.subr.mxu0 %v187
    %674 = vmatpush1.msra.mxu0 %v186
    %675 = vmatprep.subr.mxu0 %v183
    %676 = vmatpush1.msra.mxu0 %v182
    %677 = vmatprep.subr.mxu0 %v307
    %678 = vmatpush2.msra.mxu0 %v306
    %679 = vmatprep.subr.mxu0 %v303
    %680 = vmatpush2.msra.mxu0 %v302
    %681 = vmatprep.subr.mxu0 %v299
    %682 = vmatpush2.msra.mxu0 %v298
    %683 = vmatprep.subr.mxu0 %v295
    %684 = vmatpush2.msra.mxu0 %v294
    %685 = vmatprep.subr.mxu0 %v291
    %686 = vmatpush2.msra.mxu0 %v290
    %687 = vmatprep.subr.mxu0 %v287
    %688 = vmatpush2.msra.mxu0 %v286
    %689 = vmatprep.subr.mxu0 %v283
    %690 = vmatpush2.msra.mxu0 %v282
    %691 = vmatprep.subr.mxu0 %v279
    %692 = vmatpush2.msra.mxu0 %v278
    %693 = vmatprep.subr.mxu0 %v275
    %694 = vmatpush2.msra.mxu0 %v274
    %695 = vmatprep.subr.mxu0 %v271
    %696 = vmatpush2.msra.mxu0 %v270
    %697 = vmatprep.subr.mxu0 %v267
    %698 = vmatpush2.msra.mxu0 %v266
    %699 = vmatprep.subr.mxu0 %v263
    %700 = vmatpush2.msra.mxu0 %v262
    %701 = vmatprep.subr.mxu0 %v259
    %702 = vmatpush2.msra.mxu0 %v258
    %703 = vmatprep.subr.mxu0 %v255
    %704 = vmatpush2.msra.mxu0 %v254
    %705 = vmatprep.subr.mxu0 %v251
    %706 = vmatpush2.msra.mxu0 %v250
    %707 = vmatprep.subr.mxu0 %v247
    %708 = vmatpush2.msra.mxu0 %v246
    %709 = vmatprep.mubr.f32.mxu0 %v569
    %710 = vmatmul.mubr.f32.gmra.mxu0 %v568
    %v711 = vpop.f32.mrf.mxu0
    %v712 = vadd.f32 %v641, %v711
    %v713 = vpop.f32.mrf.mxu0
    %v714 = vadd.f32 %v643, %v713
    %715 = vdwg.mxu0
    %716 = vmatprep.subr.mxu0 %v371
    %717 = vmatpush1.msra.mxu0 %v370
    %718 = vmatprep.subr.mxu0 %v367
    %719 = vmatpush1.msra.mxu0 %v366
    %720 = vmatprep.subr.mxu0 %v363
    %721 = vmatpush1.msra.mxu0 %v362
    %722 = vmatprep.subr.mxu0 %v359
    %723 = vmatpush1.msra.mxu0 %v358
    %724 = vmatprep.subr.mxu0 %v355
    %725 = vmatpush1.msra.mxu0 %v354
    %726 = vmatprep.subr.mxu0 %v351
    %727 = vmatpush1.msra.mxu0 %v350
    %728 = vmatprep.subr.mxu0 %v347
    %729 = vmatpush1.msra.mxu0 %v346
    %730 = vmatprep.subr.mxu0 %v343
    %731 = vmatpush1.msra.mxu0 %v342
    %732 = vmatprep.subr.mxu0 %v339
    %733 = vmatpush1.msra.mxu0 %v338
    %734 = vmatprep.subr.mxu0 %v335
    %735 = vmatpush1.msra.mxu0 %v334
    %736 = vmatprep.subr.mxu0 %v331
    %737 = vmatpush1.msra.mxu0 %v330
    %738 = vmatprep.subr.mxu0 %v327
    %739 = vmatpush1.msra.mxu0 %v326
    %740 = vmatprep.subr.mxu0 %v323
    %741 = vmatpush1.msra.mxu0 %v322
    %742 = vmatprep.subr.mxu0 %v319
    %743 = vmatpush1.msra.mxu0 %v318
    %744 = vmatprep.subr.mxu0 %v315
    %745 = vmatpush1.msra.mxu0 %v314
    %746 = vmatprep.subr.mxu0 %v311
    %747 = vmatpush1.msra.mxu0 %v310
    %748 = vmatprep.subr.mxu0 %v435
    %749 = vmatpush2.msra.mxu0 %v434
    %750 = vmatprep.subr.mxu0 %v431
    %751 = vmatpush2.msra.mxu0 %v430
    %752 = vmatprep.subr.mxu0 %v427
    %753 = vmatpush2.msra.mxu0 %v426
    %754 = vmatprep.subr.mxu0 %v423
    %755 = vmatpush2.msra.mxu0 %v422
    %756 = vmatprep.subr.mxu0 %v419
    %757 = vmatpush2.msra.mxu0 %v418
    %758 = vmatprep.subr.mxu0 %v415
    %759 = vmatpush2.msra.mxu0 %v414
    %760 = vmatprep.subr.mxu0 %v411
    %761 = vmatpush2.msra.mxu0 %v410
    %762 = vmatprep.subr.mxu0 %v407
    %763 = vmatpush2.msra.mxu0 %v406
    %764 = vmatprep.subr.mxu0 %v403
    %765 = vmatpush2.msra.mxu0 %v402
    %766 = vmatprep.subr.mxu0 %v399
    %767 = vmatpush2.msra.mxu0 %v398
    %768 = vmatprep.subr.mxu0 %v395
    %769 = vmatpush2.msra.mxu0 %v394
    %770 = vmatprep.subr.mxu0 %v391
    %771 = vmatpush2.msra.mxu0 %v390
    %772 = vmatprep.subr.mxu0 %v387
    %773 = vmatpush2.msra.mxu0 %v386
    %774 = vmatprep.subr.mxu0 %v383
    %775 = vmatpush2.msra.mxu0 %v382
    %776 = vmatprep.subr.mxu0 %v379
    %777 = vmatpush2.msra.mxu0 %v378
    %778 = vmatprep.subr.mxu0 %v375
    %779 = vmatpush2.msra.mxu0 %v374
    %780 = vmatprep.mubr.f32.mxu0 %v571
    %781 = vmatmul.mubr.f32.gmra.mxu0 %v570
    %v782 = vpop.f32.mrf.mxu0
    %v783 = vadd.f32 %v712, %v782
    %v784 = vpop.f32.mrf.mxu0
    %v785 = vadd.f32 %v714, %v784
    %786 = vdwg.mxu0
    %787 = vmatprep.subr.mxu0 %v499
    %788 = vmatpush1.msra.mxu0 %v498
    %789 = vmatprep.subr.mxu0 %v495
    %790 = vmatpush1.msra.mxu0 %v494
    %791 = vmatprep.subr.mxu0 %v491
    %792 = vmatpush1.msra.mxu0 %v490
    %793 = vmatprep.subr.mxu0 %v487
    %794 = vmatpush1.msra.mxu0 %v486
    %795 = vmatprep.subr.mxu0 %v483
    %796 = vmatpush1.msra.mxu0 %v482
    %797 = vmatprep.subr.mxu0 %v479
    %798 = vmatpush1.msra.mxu0 %v478
    %799 = vmatprep.subr.mxu0 %v475
    %800 = vmatpush1.msra.mxu0 %v474
    %801 = vmatprep.subr.mxu0 %v471
    %802 = vmatpush1.msra.mxu0 %v470
    %803 = vmatprep.subr.mxu0 %v467
    %804 = vmatpush1.msra.mxu0 %v466
    %805 = vmatprep.subr.mxu0 %v463
    %806 = vmatpush1.msra.mxu0 %v462
    %807 = vmatprep.subr.mxu0 %v459
    %808 = vmatpush1.msra.mxu0 %v458
    %809 = vmatprep.subr.mxu0 %v455
    %810 = vmatpush1.msra.mxu0 %v454
    %811 = vmatprep.subr.mxu0 %v451
    %812 = vmatpush1.msra.mxu0 %v450
    %813 = vmatprep.subr.mxu0 %v447
    %814 = vmatpush1.msra.mxu0 %v446
    %815 = vmatprep.subr.mxu0 %v443
    %816 = vmatpush1.msra.mxu0 %v442
    %817 = vmatprep.subr.mxu0 %v439
    %818 = vmatpush1.msra.mxu0 %v438
    %819 = vmatprep.subr.mxu0 %v563
    %820 = vmatpush2.msra.mxu0 %v562
    %821 = vmatprep.subr.mxu0 %v559
    %822 = vmatpush2.msra.mxu0 %v558
    %823 = vmatprep.subr.mxu0 %v555
    %824 = vmatpush2.msra.mxu0 %v554
    %825 = vmatprep.subr.mxu0 %v551
    %826 = vmatpush2.msra.mxu0 %v550
    %827 = vmatprep.subr.mxu0 %v547
    %828 = vmatpush2.msra.mxu0 %v546
    %829 = vmatprep.subr.mxu0 %v543
    %830 = vmatpush2.msra.mxu0 %v542
    %831 = vmatprep.subr.mxu0 %v539
    %832 = vmatpush2.msra.mxu0 %v538
    %833 = vmatprep.subr.mxu0 %v535
    %834 = vmatpush2.msra.mxu0 %v534
    %835 = vmatprep.subr.mxu0 %v531
    %836 = vmatpush2.msra.mxu0 %v530
    %837 = vmatprep.subr.mxu0 %v527
    %838 = vmatpush2.msra.mxu0 %v526
    %839 = vmatprep.subr.mxu0 %v523
    %840 = vmatpush2.msra.mxu0 %v522
    %841 = vmatprep.subr.mxu0 %v519
    %842 = vmatpush2.msra.mxu0 %v518
    %843 = vmatprep.subr.mxu0 %v515
    %844 = vmatpush2.msra.mxu0 %v514
    %845 = vmatprep.subr.mxu0 %v511
    %846 = vmatpush2.msra.mxu0 %v510
    %847 = vmatprep.subr.mxu0 %v507
    %848 = vmatpush2.msra.mxu0 %v506
    %849 = vmatprep.subr.mxu0 %v503
    %850 = vmatpush2.msra.mxu0 %v502
    %851 = vmatprep.mubr.f32.mxu0 %v573
    %852 = vmatmul.mubr.f32.gmra.mxu0 %v572
    %v853 = vpop.f32.mrf.mxu0
    %v854 = vadd.f32 %v783, %v853
    %v855 = vpop.f32.mrf.mxu0
    %v856 = vadd.f32 %v785, %v855
    %857 = vdwg.mxu0
    %858 = vmatprep.subr.mxu0 %v117
    %859 = vmatpush1.msra.mxu0 %v116
    %860 = vmatprep.subr.mxu0 %v113
    %861 = vmatpush1.msra.mxu0 %v112
    %862 = vmatprep.subr.mxu0 %v109
    %863 = vmatpush1.msra.mxu0 %v108
    %864 = vmatprep.subr.mxu0 %v105
    %865 = vmatpush1.msra.mxu0 %v104
    %866 = vmatprep.subr.mxu0 %v101
    %867 = vmatpush1.msra.mxu0 %v100
    %868 = vmatprep.subr.mxu0 %v97
    %869 = vmatpush1.msra.mxu0 %v96
    %870 = vmatprep.subr.mxu0 %v93
    %871 = vmatpush1.msra.mxu0 %v92
    %872 = vmatprep.subr.mxu0 %v89
    %873 = vmatpush1.msra.mxu0 %v88
    %874 = vmatprep.subr.mxu0 %v85
    %875 = vmatpush1.msra.mxu0 %v84
    %876 = vmatprep.subr.mxu0 %v81
    %877 = vmatpush1.msra.mxu0 %v80
    %878 = vmatprep.subr.mxu0 %v77
    %879 = vmatpush1.msra.mxu0 %v76
    %880 = vmatprep.subr.mxu0 %v73
    %881 = vmatpush1.msra.mxu0 %v72
    %882 = vmatprep.subr.mxu0 %v69
    %883 = vmatpush1.msra.mxu0 %v68
    %884 = vmatprep.subr.mxu0 %v65
    %885 = vmatpush1.msra.mxu0 %v64
    %886 = vmatprep.subr.mxu0 %v61
    %887 = vmatpush1.msra.mxu0 %v60
    %888 = vmatprep.subr.mxu0 %v57
    %889 = vmatpush1.msra.mxu0 %v56
    %890 = vmatprep.subr.mxu0 %v181
    %891 = vmatpush2.msra.mxu0 %v180
    %892 = vmatprep.subr.mxu0 %v177
    %893 = vmatpush2.msra.mxu0 %v176
    %894 = vmatprep.subr.mxu0 %v173
    %895 = vmatpush2.msra.mxu0 %v172
    %896 = vmatprep.subr.mxu0 %v169
    %897 = vmatpush2.msra.mxu0 %v168
    %898 = vmatprep.subr.mxu0 %v165
    %899 = vmatpush2.msra.mxu0 %v164
    %900 = vmatprep.subr.mxu0 %v161
    %901 = vmatpush2.msra.mxu0 %v160
    %902 = vmatprep.subr.mxu0 %v157
    %903 = vmatpush2.msra.mxu0 %v156
    %904 = vmatprep.subr.mxu0 %v153
    %905 = vmatpush2.msra.mxu0 %v152
    %906 = vmatprep.subr.mxu0 %v149
    %907 = vmatpush2.msra.mxu0 %v148
    %908 = vmatprep.subr.mxu0 %v145
    %909 = vmatpush2.msra.mxu0 %v144
    %910 = vmatprep.subr.mxu0 %v141
    %911 = vmatpush2.msra.mxu0 %v140
    %912 = vmatprep.subr.mxu0 %v137
    %913 = vmatpush2.msra.mxu0 %v136
    %914 = vmatprep.subr.mxu0 %v133
    %915 = vmatpush2.msra.mxu0 %v132
    %916 = vmatprep.subr.mxu0 %v129
    %917 = vmatpush2.msra.mxu0 %v128
    %918 = vmatprep.subr.mxu0 %v125
    %919 = vmatpush2.msra.mxu0 %v124
    %920 = vmatprep.subr.mxu0 %v121
    %921 = vmatpush2.msra.mxu0 %v120
    %922 = vmatprep.mubr.f32.mxu0 %v567
    %923 = vmatmul.mubr.f32.gmra.mxu0 %v566
    %v924 = vpop.f32.mrf.mxu0
    %v925 = vadd.f32 0.0, %v924
    %v926 = vpop.f32.mrf.mxu0
    %v927 = vadd.f32 0.0, %v926
    %928 = vdwg.mxu0
    %929 = vmatprep.subr.mxu0 %v245
    %930 = vmatpush1.msra.mxu0 %v244
    %931 = vmatprep.subr.mxu0 %v241
    %932 = vmatpush1.msra.mxu0 %v240
    %933 = vmatprep.subr.mxu0 %v237
    %934 = vmatpush1.msra.mxu0 %v236
    %935 = vmatprep.subr.mxu0 %v233
    %936 = vmatpush1.msra.mxu0 %v232
    %937 = vmatprep.subr.mxu0 %v229
    %938 = vmatpush1.msra.mxu0 %v228
    %939 = vmatprep.subr.mxu0 %v225
    %940 = vmatpush1.msra.mxu0 %v224
    %941 = vmatprep.subr.mxu0 %v221
    %942 = vmatpush1.msra.mxu0 %v220
    %943 = vmatprep.subr.mxu0 %v217
    %944 = vmatpush1.msra.mxu0 %v216
    %945 = vmatprep.subr.mxu0 %v213
    %946 = vmatpush1.msra.mxu0 %v212
    %947 = vmatprep.subr.mxu0 %v209
    %948 = vmatpush1.msra.mxu0 %v208
    %949 = vmatprep.subr.mxu0 %v205
    %950 = vmatpush1.msra.mxu0 %v204
    %951 = vmatprep.subr.mxu0 %v201
    %952 = vmatpush1.msra.mxu0 %v200
    %953 = vmatprep.subr.mxu0 %v197
    %954 = vmatpush1.msra.mxu0 %v196
    %955 = vmatprep.subr.mxu0 %v193
    %956 = vmatpush1.msra.mxu0 %v192
    %957 = vmatprep.subr.mxu0 %v189
    %958 = vmatpush1.msra.mxu0 %v188
    %959 = vmatprep.subr.mxu0 %v185
    %960 = vmatpush1.msra.mxu0 %v184
    %961 = vmatprep.subr.mxu0 %v309
    %962 = vmatpush2.msra.mxu0 %v308
    %963 = vmatprep.subr.mxu0 %v305
    %964 = vmatpush2.msra.mxu0 %v304
    %965 = vmatprep.subr.mxu0 %v301
    %966 = vmatpush2.msra.mxu0 %v300
    %967 = vmatprep.subr.mxu0 %v297
    %968 = vmatpush2.msra.mxu0 %v296
    %969 = vmatprep.subr.mxu0 %v293
    %970 = vmatpush2.msra.mxu0 %v292
    %971 = vmatprep.subr.mxu0 %v289
    %972 = vmatpush2.msra.mxu0 %v288
    %973 = vmatprep.subr.mxu0 %v285
    %974 = vmatpush2.msra.mxu0 %v284
    %975 = vmatprep.subr.mxu0 %v281
    %976 = vmatpush2.msra.mxu0 %v280
    %977 = vmatprep.subr.mxu0 %v277
    %978 = vmatpush2.msra.mxu0 %v276
    %979 = vmatprep.subr.mxu0 %v273
    %980 = vmatpush2.msra.mxu0 %v272
    %981 = vmatprep.subr.mxu0 %v269
    %982 = vmatpush2.msra.mxu0 %v268
    %983 = vmatprep.subr.mxu0 %v265
    %984 = vmatpush2.msra.mxu0 %v264
    %985 = vmatprep.subr.mxu0 %v261
    %986 = vmatpush2.msra.mxu0 %v260
    %987 = vmatprep.subr.mxu0 %v257
    %988 = vmatpush2.msra.mxu0 %v256
    %989 = vmatprep.subr.mxu0 %v253
    %990 = vmatpush2.msra.mxu0 %v252
    %991 = vmatprep.subr.mxu0 %v249
    %992 = vmatpush2.msra.mxu0 %v248
    %993 = vmatprep.mubr.f32.mxu0 %v569
    %994 = vmatmul.mubr.f32.gmra.mxu0 %v568
    %v995 = vpop.f32.mrf.mxu0
    %v996 = vadd.f32 %v925, %v995
    %v997 = vpop.f32.mrf.mxu0
    %v998 = vadd.f32 %v927, %v997
    %999 = vdwg.mxu0
    %1000 = vmatprep.subr.mxu0 %v373
    %1001 = vmatpush1.msra.mxu0 %v372
    %1002 = vmatprep.subr.mxu0 %v369
    %1003 = vmatpush1.msra.mxu0 %v368
    %1004 = vmatprep.subr.mxu0 %v365
    %1005 = vmatpush1.msra.mxu0 %v364
    %1006 = vmatprep.subr.mxu0 %v361
    %1007 = vmatpush1.msra.mxu0 %v360
    %1008 = vmatprep.subr.mxu0 %v357
    %1009 = vmatpush1.msra.mxu0 %v356
    %1010 = vmatprep.subr.mxu0 %v353
    %1011 = vmatpush1.msra.mxu0 %v352
    %1012 = vmatprep.subr.mxu0 %v349
    %1013 = vmatpush1.msra.mxu0 %v348
    %1014 = vmatprep.subr.mxu0 %v345
    %1015 = vmatpush1.msra.mxu0 %v344
    %1016 = vmatprep.subr.mxu0 %v341
    %1017 = vmatpush1.msra.mxu0 %v340
    %1018 = vmatprep.subr.mxu0 %v337
    %1019 = vmatpush1.msra.mxu0 %v336
    %1020 = vmatprep.subr.mxu0 %v333
    %1021 = vmatpush1.msra.mxu0 %v332
    %1022 = vmatprep.subr.mxu0 %v329
    %1023 = vmatpush1.msra.mxu0 %v328
    %1024 = vmatprep.subr.mxu0 %v325
    %1025 = vmatpush1.msra.mxu0 %v324
    %1026 = vmatprep.subr.mxu0 %v321
    %1027 = vmatpush1.msra.mxu0 %v320
    %1028 = vmatprep.subr.mxu0 %v317
    %1029 = vmatpush1.msra.mxu0 %v316
    %1030 = vmatprep.subr.mxu0 %v313
    %1031 = vmatpush1.msra.mxu0 %v312
    %1032 = vmatprep.subr.mxu0 %v437
    %1033 = vmatpush2.msra.mxu0 %v436
    %1034 = vmatprep.subr.mxu0 %v433
    %1035 = vmatpush2.msra.mxu0 %v432
    %1036 = vmatprep.subr.mxu0 %v429
    %1037 = vmatpush2.msra.mxu0 %v428
    %1038 = vmatprep.subr.mxu0 %v425
    %1039 = vmatpush2.msra.mxu0 %v424
    %1040 = vmatprep.subr.mxu0 %v421
    %1041 = vmatpush2.msra.mxu0 %v420
    %1042 = vmatprep.subr.mxu0 %v417
    %1043 = vmatpush2.msra.mxu0 %v416
    %1044 = vmatprep.subr.mxu0 %v413
    %1045 = vmatpush2.msra.mxu0 %v412
    %1046 = vmatprep.subr.mxu0 %v409
    %1047 = vmatpush2.msra.mxu0 %v408
    %1048 = vmatprep.subr.mxu0 %v405
    %1049 = vmatpush2.msra.mxu0 %v404
    %1050 = vmatprep.subr.mxu0 %v401
    %1051 = vmatpush2.msra.mxu0 %v400
    %1052 = vmatprep.subr.mxu0 %v397
    %1053 = vmatpush2.msra.mxu0 %v396
    %1054 = vmatprep.subr.mxu0 %v393
    %1055 = vmatpush2.msra.mxu0 %v392
    %1056 = vmatprep.subr.mxu0 %v389
    %1057 = vmatpush2.msra.mxu0 %v388
    %1058 = vmatprep.subr.mxu0 %v385
    %1059 = vmatpush2.msra.mxu0 %v384
    %1060 = vmatprep.subr.mxu0 %v381
    %1061 = vmatpush2.msra.mxu0 %v380
    %1062 = vmatprep.subr.mxu0 %v377
    %1063 = vmatpush2.msra.mxu0 %v376
    %1064 = vmatprep.mubr.f32.mxu0 %v571
    %1065 = vmatmul.mubr.f32.gmra.mxu0 %v570
    %v1066 = vpop.f32.mrf.mxu0
    %v1067 = vadd.f32 %v996, %v1066
    %v1068 = vpop.f32.mrf.mxu0
    %v1069 = vadd.f32 %v998, %v1068
    %1070 = vdwg.mxu0
    %1071 = vmatprep.subr.mxu0 %v501
    %1072 = vmatpush1.msra.mxu0 %v500
    %1073 = vmatprep.subr.mxu0 %v497
    %1074 = vmatpush1.msra.mxu0 %v496
    %1075 = vmatprep.subr.mxu0 %v493
    %1076 = vmatpush1.msra.mxu0 %v492
    %1077 = vmatprep.subr.mxu0 %v489
    %1078 = vmatpush1.msra.mxu0 %v488
    %1079 = vmatprep.subr.mxu0 %v485
    %1080 = vmatpush1.msra.mxu0 %v484
    %1081 = vmatprep.subr.mxu0 %v481
    %1082 = vmatpush1.msra.mxu0 %v480
    %1083 = vmatprep.subr.mxu0 %v477
    %1084 = vmatpush1.msra.mxu0 %v476
    %1085 = vmatprep.subr.mxu0 %v473
    %1086 = vmatpush1.msra.mxu0 %v472
    %1087 = vmatprep.subr.mxu0 %v469
    %1088 = vmatpush1.msra.mxu0 %v468
    %1089 = vmatprep.subr.mxu0 %v465
    %1090 = vmatpush1.msra.mxu0 %v464
    %1091 = vmatprep.subr.mxu0 %v461
    %1092 = vmatpush1.msra.mxu0 %v460
    %1093 = vmatprep.subr.mxu0 %v457
    %1094 = vmatpush1.msra.mxu0 %v456
    %1095 = vmatprep.subr.mxu0 %v453
    %1096 = vmatpush1.msra.mxu0 %v452
    %1097 = vmatprep.subr.mxu0 %v449
    %1098 = vmatpush1.msra.mxu0 %v448
    %1099 = vmatprep.subr.mxu0 %v445
    %1100 = vmatpush1.msra.mxu0 %v444
    %1101 = vmatprep.subr.mxu0 %v441
    %1102 = vmatpush1.msra.mxu0 %v440
    %1103 = vmatprep.subr.mxu0 %v565
    %1104 = vmatpush2.msra.mxu0 %v564
    %1105 = vmatprep.subr.mxu0 %v561
    %1106 = vmatpush2.msra.mxu0 %v560
    %1107 = vmatprep.subr.mxu0 %v557
    %1108 = vmatpush2.msra.mxu0 %v556
    %1109 = vmatprep.subr.mxu0 %v553
    %1110 = vmatpush2.msra.mxu0 %v552
    %1111 = vmatprep.subr.mxu0 %v549
    %1112 = vmatpush2.msra.mxu0 %v548
    %1113 = vmatprep.subr.mxu0 %v545
    %1114 = vmatpush2.msra.mxu0 %v544
    %1115 = vmatprep.subr.mxu0 %v541
    %1116 = vmatpush2.msra.mxu0 %v540
    %1117 = vmatprep.subr.mxu0 %v537
    %1118 = vmatpush2.msra.mxu0 %v536
    %1119 = vmatprep.subr.mxu0 %v533
    %1120 = vmatpush2.msra.mxu0 %v532
    %1121 = vmatprep.subr.mxu0 %v529
    %1122 = vmatpush2.msra.mxu0 %v528
    %1123 = vmatprep.subr.mxu0 %v525
    %1124 = vmatpush2.msra.mxu0 %v524
    %1125 = vmatprep.subr.mxu0 %v521
    %1126 = vmatpush2.msra.mxu0 %v520
    %1127 = vmatprep.subr.mxu0 %v517
    %1128 = vmatpush2.msra.mxu0 %v516
    %1129 = vmatprep.subr.mxu0 %v513
    %1130 = vmatpush2.msra.mxu0 %v512
    %1131 = vmatprep.subr.mxu0 %v509
    %1132 = vmatpush2.msra.mxu0 %v508
    %1133 = vmatprep.subr.mxu0 %v505
    %1134 = vmatpush2.msra.mxu0 %v504
    %1135 = vmatprep.mubr.f32.mxu0 %v573
    %1136 = vmatmul.mubr.f32.gmra.mxu0 %v572
    %v1137 = vpop.f32.mrf.mxu0
    %v1138 = vadd.f32 %v1067, %v1137
    %v1139 = vpop.f32.mrf.mxu0
    %v1140 = vadd.f32 %v1069, %v1139
    %1141 = vdwg.mxu0
    %vm1142 = vcmp.gt.f32.partialorder %v854, 0.0
    %vm1143 = vcmp.gt.f32.partialorder %v856, 0.0
    %vm1144 = vcmp.gt.f32.partialorder %v1138, 0.0
    %vm1145 = vcmp.gt.f32.partialorder %v1140, 0.0
    %v1146 = vmul.f32 %v854, 0.2
    %v1147 = vmul.f32 %v856, 0.2
    %v1148 = vmul.f32 %v1138, 0.2
    %v1149 = vmul.f32 %v1140, 0.2
    %v1150 = vsel %vm1142, %v854, %v1146
    %v1151 = vsel %vm1143, %v856, %v1147
    %v1152 = vsel %vm1144, %v1138, %v1148
    %v1153 = vsel %vm1145, %v1140, %v1149
    %v1154 = vld [vmem:[#allocation7] sm:$0xff]
    %v1155 = vld [vmem:[#allocation7 + $0x8] sm:$0xff]
    %v1156 = vld [vmem:[#allocation7 + $0x10] sm:$0xff]
    %v1157 = vld [vmem:[#allocation7 + $0x18] sm:$0xff]
    %v1158 = vld [vmem:[#allocation7 + $0x20] sm:$0xff]
    %v1159 = vld [vmem:[#allocation7 + $0x28] sm:$0xff]
    %v1160 = vld [vmem:[#allocation7 + $0x30] sm:$0xff]
    %v1161 = vld [vmem:[#allocation7 + $0x38] sm:$0xff]
    %v1162 = vld [vmem:[#allocation7 + $0x40] sm:$0xff]
    %v1163 = vld [vmem:[#allocation7 + $0x48] sm:$0xff]
    %v1164 = vld [vmem:[#allocation7 + $0x50] sm:$0xff]
    %v1165 = vld [vmem:[#allocation7 + $0x58] sm:$0xff]
    %v1166 = vld [vmem:[#allocation7 + $0x60] sm:$0xff]
    %v1167 = vld [vmem:[#allocation7 + $0x68] sm:$0xff]
    %v1168 = vld [vmem:[#allocation7 + $0x70] sm:$0xff]
    %v1169 = vld [vmem:[#allocation7 + $0x78] sm:$0xff]
    %v1170 = vld [vmem:[#allocation7 + $0x80] sm:$0xff]
    %v1171 = vld [vmem:[#allocation7 + $0x88] sm:$0xff]
    %v1172 = vld [vmem:[#allocation7 + $0x90] sm:$0xff]
    %v1173 = vld [vmem:[#allocation7 + $0x98] sm:$0xff]
    %v1174 = vld [vmem:[#allocation7 + $0xa0] sm:$0xff]
    %v1175 = vld [vmem:[#allocation7 + $0xa8] sm:$0xff]
    %v1176 = vld [vmem:[#allocation7 + $0xb0] sm:$0xff]
    %v1177 = vld [vmem:[#allocation7 + $0xb8] sm:$0xff]
    %v1178 = vld [vmem:[#allocation7 + $0xc0] sm:$0xff]
    %v1179 = vld [vmem:[#allocation7 + $0xc8] sm:$0xff]
    %v1180 = vld [vmem:[#allocation7 + $0xd0] sm:$0xff]
    %v1181 = vld [vmem:[#allocation7 + $0xd8] sm:$0xff]
    %v1182 = vld [vmem:[#allocation7 + $0xe0] sm:$0xff]
    %v1183 = vld [vmem:[#allocation7 + $0xe8] sm:$0xff]
    %v1184 = vld [vmem:[#allocation7 + $0xf0] sm:$0xff]
    %v1185 = vld [vmem:[#allocation7 + $0xf8] sm:$0xff]
    %v1186 = vld [vmem:[#allocation7 + $0x100] sm:$0xff]
    %v1187 = vld [vmem:[#allocation7 + $0x108] sm:$0xff]
    %v1188 = vld [vmem:[#allocation7 + $0x110] sm:$0xff]
    %v1189 = vld [vmem:[#allocation7 + $0x118] sm:$0xff]
    %v1190 = vld [vmem:[#allocation7 + $0x120] sm:$0xff]
    %v1191 = vld [vmem:[#allocation7 + $0x128] sm:$0xff]
    %v1192 = vld [vmem:[#allocation7 + $0x130] sm:$0xff]
    %v1193 = vld [vmem:[#allocation7 + $0x138] sm:$0xff]
    %v1194 = vld [vmem:[#allocation7 + $0x140] sm:$0xff]
    %v1195 = vld [vmem:[#allocation7 + $0x148] sm:$0xff]
    %v1196 = vld [vmem:[#allocation7 + $0x150] sm:$0xff]
    %v1197 = vld [vmem:[#allocation7 + $0x158] sm:$0xff]
    %v1198 = vld [vmem:[#allocation7 + $0x160] sm:$0xff]
    %v1199 = vld [vmem:[#allocation7 + $0x168] sm:$0xff]
    %v1200 = vld [vmem:[#allocation7 + $0x170] sm:$0xff]
    %v1201 = vld [vmem:[#allocation7 + $0x178] sm:$0xff]
    %v1202 = vld [vmem:[#allocation7 + $0x180] sm:$0xff]
    %v1203 = vld [vmem:[#allocation7 + $0x188] sm:$0xff]
    %v1204 = vld [vmem:[#allocation7 + $0x190] sm:$0xff]
    %v1205 = vld [vmem:[#allocation7 + $0x198] sm:$0xff]
    %v1206 = vld [vmem:[#allocation7 + $0x1a0] sm:$0xff]
    %v1207 = vld [vmem:[#allocation7 + $0x1a8] sm:$0xff]
    %v1208 = vld [vmem:[#allocation7 + $0x1b0] sm:$0xff]
    %v1209 = vld [vmem:[#allocation7 + $0x1b8] sm:$0xff]
    %v1210 = vld [vmem:[#allocation7 + $0x1c0] sm:$0xff]
    %v1211 = vld [vmem:[#allocation7 + $0x1c8] sm:$0xff]
    %v1212 = vld [vmem:[#allocation7 + $0x1d0] sm:$0xff]
    %v1213 = vld [vmem:[#allocation7 + $0x1d8] sm:$0xff]
    %v1214 = vld [vmem:[#allocation7 + $0x1e0] sm:$0xff]
    %v1215 = vld [vmem:[#allocation7 + $0x1e8] sm:$0xff]
    %v1216 = vld [vmem:[#allocation7 + $0x1f0] sm:$0xff]
    %v1217 = vld [vmem:[#allocation7 + $0x1f8] sm:$0xff]
    %1218 = vmatprep.subr.mxu0 0.0
    %1219 = vmatpush1.msra.mxu0 %v1169
    %1220 = vmatprep.subr.mxu0 0.0
    %1221 = vmatpush1.msra.mxu0 %v1168
    %1222 = vmatprep.subr.mxu0 0.0
    %1223 = vmatpush1.msra.mxu0 %v1167
    %1224 = vmatprep.subr.mxu0 0.0
    %1225 = vmatpush1.msra.mxu0 %v1166
    %1226 = vmatprep.subr.mxu0 0.0
    %1227 = vmatpush1.msra.mxu0 %v1165
    %1228 = vmatprep.subr.mxu0 0.0
    %1229 = vmatpush1.msra.mxu0 %v1164
    %1230 = vmatprep.subr.mxu0 0.0
    %1231 = vmatpush1.msra.mxu0 %v1163
    %1232 = vmatprep.subr.mxu0 0.0
    %1233 = vmatpush1.msra.mxu0 %v1162
    %1234 = vmatprep.subr.mxu0 0.0
    %1235 = vmatpush1.msra.mxu0 %v1161
    %1236 = vmatprep.subr.mxu0 0.0
    %1237 = vmatpush1.msra.mxu0 %v1160
    %1238 = vmatprep.subr.mxu0 0.0
    %1239 = vmatpush1.msra.mxu0 %v1159
    %1240 = vmatprep.subr.mxu0 0.0
    %1241 = vmatpush1.msra.mxu0 %v1158
    %1242 = vmatprep.subr.mxu0 0.0
    %1243 = vmatpush1.msra.mxu0 %v1157
    %1244 = vmatprep.subr.mxu0 0.0
    %1245 = vmatpush1.msra.mxu0 %v1156
    %1246 = vmatprep.subr.mxu0 0.0
    %1247 = vmatpush1.msra.mxu0 %v1155
    %1248 = vmatprep.subr.mxu0 0.0
    %1249 = vmatpush1.msra.mxu0 %v1154
    %1250 = vmatprep.subr.mxu0 0.0
    %1251 = vmatpush2.msra.mxu0 %v1185
    %1252 = vmatprep.subr.mxu0 0.0
    %1253 = vmatpush2.msra.mxu0 %v1184
    %1254 = vmatprep.subr.mxu0 0.0
    %1255 = vmatpush2.msra.mxu0 %v1183
    %1256 = vmatprep.subr.mxu0 0.0
    %1257 = vmatpush2.msra.mxu0 %v1182
    %1258 = vmatprep.subr.mxu0 0.0
    %1259 = vmatpush2.msra.mxu0 %v1181
    %1260 = vmatprep.subr.mxu0 0.0
    %1261 = vmatpush2.msra.mxu0 %v1180
    %1262 = vmatprep.subr.mxu0 0.0
    %1263 = vmatpush2.msra.mxu0 %v1179
    %1264 = vmatprep.subr.mxu0 0.0
    %1265 = vmatpush2.msra.mxu0 %v1178
    %1266 = vmatprep.subr.mxu0 0.0
    %1267 = vmatpush2.msra.mxu0 %v1177
    %1268 = vmatprep.subr.mxu0 0.0
    %1269 = vmatpush2.msra.mxu0 %v1176
    %1270 = vmatprep.subr.mxu0 0.0
    %1271 = vmatpush2.msra.mxu0 %v1175
    %1272 = vmatprep.subr.mxu0 0.0
    %1273 = vmatpush2.msra.mxu0 %v1174
    %1274 = vmatprep.subr.mxu0 0.0
    %1275 = vmatpush2.msra.mxu0 %v1173
    %1276 = vmatprep.subr.mxu0 0.0
    %1277 = vmatpush2.msra.mxu0 %v1172
    %1278 = vmatprep.subr.mxu0 0.0
    %1279 = vmatpush2.msra.mxu0 %v1171
    %1280 = vmatprep.subr.mxu0 0.0
    %1281 = vmatpush2.msra.mxu0 %v1170
    %1282 = vmatprep.mubr.f32.mxu0 %v1151
    %1283 = vmatmul.mubr.f32.gmra.mxu0 %v1150
    %v1284 = vpop.f32.mrf.mxu0
    %v1285 = vadd.f32 0.0, %v1284
    %v1286 = vpop.f32.mrf.mxu0
    %1287 = vdwg.mxu0
    %1288 = vmatprep.subr.mxu0 0.0
    %1289 = vmatpush1.msra.mxu0 %v1201
    %1290 = vmatprep.subr.mxu0 0.0
    %1291 = vmatpush1.msra.mxu0 %v1200
    %1292 = vmatprep.subr.mxu0 0.0
    %1293 = vmatpush1.msra.mxu0 %v1199
    %1294 = vmatprep.subr.mxu0 0.0
    %1295 = vmatpush1.msra.mxu0 %v1198
    %1296 = vmatprep.subr.mxu0 0.0
    %1297 = vmatpush1.msra.mxu0 %v1197
    %1298 = vmatprep.subr.mxu0 0.0
    %1299 = vmatpush1.msra.mxu0 %v1196
    %1300 = vmatprep.subr.mxu0 0.0
    %1301 = vmatpush1.msra.mxu0 %v1195
    %1302 = vmatprep.subr.mxu0 0.0
    %1303 = vmatpush1.msra.mxu0 %v1194
    %1304 = vmatprep.subr.mxu0 0.0
    %1305 = vmatpush1.msra.mxu0 %v1193
    %1306 = vmatprep.subr.mxu0 0.0
    %1307 = vmatpush1.msra.mxu0 %v1192
    %1308 = vmatprep.subr.mxu0 0.0
    %1309 = vmatpush1.msra.mxu0 %v1191
    %1310 = vmatprep.subr.mxu0 0.0
    %1311 = vmatpush1.msra.mxu0 %v1190
    %1312 = vmatprep.subr.mxu0 0.0
    %1313 = vmatpush1.msra.mxu0 %v1189
    %1314 = vmatprep.subr.mxu0 0.0
    %1315 = vmatpush1.msra.mxu0 %v1188
    %1316 = vmatprep.subr.mxu0 0.0
    %1317 = vmatpush1.msra.mxu0 %v1187
    %1318 = vmatprep.subr.mxu0 0.0
    %1319 = vmatpush1.msra.mxu0 %v1186
    %1320 = vmatprep.subr.mxu0 0.0
    %1321 = vmatpush2.msra.mxu0 %v1217
    %1322 = vmatprep.subr.mxu0 0.0
    %1323 = vmatpush2.msra.mxu0 %v1216
    %1324 = vmatprep.subr.mxu0 0.0
    %1325 = vmatpush2.msra.mxu0 %v1215
    %1326 = vmatprep.subr.mxu0 0.0
    %1327 = vmatpush2.msra.mxu0 %v1214
    %1328 = vmatprep.subr.mxu0 0.0
    %1329 = vmatpush2.msra.mxu0 %v1213
    %1330 = vmatprep.subr.mxu0 0.0
    %1331 = vmatpush2.msra.mxu0 %v1212
    %1332 = vmatprep.subr.mxu0 0.0
    %1333 = vmatpush2.msra.mxu0 %v1211
    %1334 = vmatprep.subr.mxu0 0.0
    %1335 = vmatpush2.msra.mxu0 %v1210
    %1336 = vmatprep.subr.mxu0 0.0
    %1337 = vmatpush2.msra.mxu0 %v1209
    %1338 = vmatprep.subr.mxu0 0.0
    %1339 = vmatpush2.msra.mxu0 %v1208
    %1340 = vmatprep.subr.mxu0 0.0
    %1341 = vmatpush2.msra.mxu0 %v1207
    %1342 = vmatprep.subr.mxu0 0.0
    %1343 = vmatpush2.msra.mxu0 %v1206
    %1344 = vmatprep.subr.mxu0 0.0
    %1345 = vmatpush2.msra.mxu0 %v1205
    %1346 = vmatprep.subr.mxu0 0.0
    %1347 = vmatpush2.msra.mxu0 %v1204
    %1348 = vmatprep.subr.mxu0 0.0
    %1349 = vmatpush2.msra.mxu0 %v1203
    %1350 = vmatprep.subr.mxu0 0.0
    %1351 = vmatpush2.msra.mxu0 %v1202
    %1352 = vmatprep.mubr.f32.mxu0 %v1153
    %1353 = vmatmul.mubr.f32.gmra.mxu0 %v1152
    %v1354 = vpop.f32.mrf.mxu0
    %v1355 = vadd.f32 %v1285, %v1354
    %v1356 = vpop.f32.mrf.mxu0
    %1357 = vdwg.mxu0
    %1358 = vst [vmem:[#allocation8] sm:$0xff] %v1355
    // Predicated region
    $region26: #{tpu_custom_call.1} parent=1 // pred_check
      _
    $region27: #{tpu_custom_call.1} parent=1 // pred_check_branch
      %1360 = sbr.rel (0) target = $region29
    $region28: #{tpu_custom_call.1} parent=1 // pred_region
      %s1362 = ssub.s32 128, 128
      %1363 = vsyncadd [#allocation4], %s1362
      %s1365 = sshll.u32 [#allocation8], 4
      %s1366 = int_to_ptr.vmem [resolvable:$true] %s1365
      %1368 = dma.vmem_to_hbm [thread:$0]  %s1366, 128, %s3, [#allocation4]
    $region29: #{tpu_custom_call.1} parent=1 // pred_fallthru
      _
    // Predicated region
    $region30: #{tpu_custom_call.1} parent=1 // pred_check
      _
    $region31: #{tpu_custom_call.1} parent=1 // pred_check_branch
      %1370 = sbr.rel (0) target = $region33
    $region32: #{tpu_custom_call.1} parent=1 // pred_region
      %1371 = dma.done [#allocation4], 128
    $region33: #{tpu_custom_call.1} parent=1 // pred_fallthru
      _
    %1372 = vsyncpa [#allocation3], 1
    %1373 = vsyncpa [#allocation6], 1
    %1374 = vsyncpa [#allocation4], 1

</llo_original>
